<compile_context>
chip_gen: v6e
topology: v6e:2x2x1
jax: 0.10.0
libtpu: 0.0.40
codegen_flags: <defaults>
</compile_context>

<pallas_src>
import math

import numpy as np
import jax
import jax.numpy as jnp
from jax.experimental import pallas as pl
from jax.experimental.pallas import tpu as pltpu


# ----------------------------------------------------------------------------
# Pallas kernel: entire CCNN2 forward (6 matmuls + bias + ReLU + skip adds)
# ----------------------------------------------------------------------------
def _ccnn2_kernel(x_ref,
                  m1, b1, m2, b2, m3, b3, m4, b4, m5, b5, m6, b6,
                  out_ref):
    def layer(act, m_ref, b_ref, relu):
        y = jnp.dot(act.astype(jnp.bfloat16), m_ref[...],
                    preferred_element_type=jnp.float32)
        y = y + b_ref[...]
        if relu:  # complex_relu == ReLU on real and imag parts independently
            y = jnp.maximum(y, 0.0)
        return y

    a0 = x_ref[...]                        # [TB, 2*1*16*16] bf16
    a1 = layer(a0, m1, b1, True)           # down1 -> [TB, 2*4*8*8]
    a2 = layer(a1, m2, b2, True)           # down2 -> [TB, 2*8*4*4]
    a3 = layer(a2, m3, b3, True)           # down3 -> [TB, 2*16*2*2]
    a4 = layer(a3, m4, b4, True)           # up3   -> [TB, 2*8*4*4]
    a5 = layer(a4 + a2, m5, b5, True)      # up2(out18+out2) -> [TB, 2*4*8*8]
    a6 = layer(a5 + a1, m6, b6, False)     # up1(out19+out1) -> [TB, 2*1*16*16]
    out_ref[...] = a6


def ccnn2_fused(x_flat, mats, biases, tile_b=128):
    """x_flat: [B, F0] bf16, mats: 6x [Fin,Fout] bf16, biases: 6x [1,Fout] f32."""
    B, F0 = x_flat.shape
    # Batch tile: full sublane tiles, capped at tile_b rows per grid step.
    TB = min(((tile_b + 7) // 8) * 8, max(8, ((B + 7) // 8) * 8))
    Bp = ((B + TB - 1) // TB) * TB
    if Bp != B:
        x_flat = jnp.pad(x_flat, ((0, Bp - B), (0, 0)))
    F_out = mats[-1].shape[1]

    args, in_specs = [x_flat], [pl.BlockSpec((TB, F0), lambda i: (i, 0))]
    flops, bytes_accessed = 0, x_flat.size * 2 + Bp * F_out * 4
    for m, b in zip(mats, biases):
        args += [m, b]
        # Weights/biases pinned to a constant block -> stay VMEM-resident.
        in_specs += [pl.BlockSpec(m.shape, lambda i: (0, 0)),
                     pl.BlockSpec(b.shape, lambda i: (0, 0))]
        flops += 2 * Bp * m.shape[0] * m.shape[1]
        bytes_accessed += m.size * 2 + b.size * 4

    out = pl.pallas_call(
        _ccnn2_kernel,
        out_shape=jax.ShapeDtypeStruct((Bp, F_out), jnp.float32),
        grid=(Bp // TB,),
        in_specs=in_specs,
        out_specs=pl.BlockSpec((TB, F_out), lambda i: (i, 0)),
        compiler_params=pltpu.CompilerParams(
            dimension_semantics=("parallel",)),
        cost_estimate=pl.CostEstimate(flops=flops, transcendentals=0,
                                      bytes_accessed=bytes_accessed),
    )(*args)
    return out[:B]


# ----------------------------------------------------------------------------
# Parameter prep: fold each complex conv / conv-transpose into a dense real
# matrix on the flattened (real|imag, C, H, W) activation vector.  Exact.
# ----------------------------------------------------------------------------
def _dense_complex_conv2d(wr, wi, H, W, stride, pad):
    # wr/wi: [Cout, Cin, kh, kw] (PyTorch Conv2d layout), numpy f32
    Cout, Cin, kh, kw = wr.shape
    Ho = (H + 2 * pad - kh) // stride + 1
    Wo = (W + 2 * pad - kw) // stride + 1
    in_sz, out_sz = Cin * H * W, Cout * Ho * Wo
    M = np.zeros((2 * in_sz, 2 * out_sz), np.float32)
    for co in range(Cout):
        for ho in range(Ho):
            for wo in range(Wo):
                o = co * Ho * Wo + ho * Wo + wo
                for ci in range(Cin):
                    for i in range(kh):
                        h = ho * stride - pad + i
                        if h < 0 or h >= H:
                            continue
                        for j in range(kw):
                            w = wo * stride - pad + j
                            if w < 0 or w >= W:
                                continue
                            p = ci * H * W + h * W + w
                            a = wr[co, ci, i, j]
                            b = wi[co, ci, i, j]
                            M[p, o] += a                    # Wr*xr -> real
                            M[in_sz + p, o] -= b            # -Wi*xi -> real
                            M[in_sz + p, out_sz + o] += a   # Wr*xi -> imag
                            M[p, out_sz + o] += b           # Wi*xr -> imag
    return M, Ho, Wo


def _dense_complex_conv_transpose2d(wr, wi, H, W, stride, pad):
    # wr/wi: [Cin, Cout, kh, kw] (PyTorch ConvTranspose2d layout), numpy f32
    Cin, Cout, kh, kw = wr.shape
    Ho = (H - 1) * stride - 2 * pad + kh
    Wo = (W - 1) * stride - 2 * pad + kw
    in_sz, out_sz = Cin * H * W, Cout * Ho * Wo
    M = np.zeros((2 * in_sz, 2 * out_sz), np.float32)
    for ci in range(Cin):
        for hi in range(H):
            for wcol in range(W):
                p = ci * H * W + hi * W + wcol
                for co in range(Cout):
                    for i in range(kh):
                        ho = hi * stride - pad + i
                        if ho < 0 or ho >= Ho:
                            continue
                        for j in range(kw):
                            wo = wcol * stride - pad + j
                            if wo < 0 or wo >= Wo:
                                continue
                            o = co * Ho * Wo + ho * Wo + wo
                            a = wr[ci, co, i, j]
                            b = wi[ci, co, i, j]
                            M[p, o] += a
                            M[in_sz + p, o] -= b
                            M[in_sz + p, out_sz + o] += a
                            M[p, out_sz + o] += b
    return M, Ho, Wo


def _dense_bias(br, bi, Ho, Wo):
    vec = np.concatenate([np.repeat(br, Ho * Wo), np.repeat(bi, Ho * Wo)])
    return vec.astype(np.float32)[None, :]


_LAYERS = (
    ("down1", False), ("down2", False), ("down3", False),
    ("up3", True), ("up2", True), ("up1", True),
)


def prepare_dense_params(params, H=16, W=16):
    mats, biases = [], []
    h, w = H, W
    for name, transpose in _LAYERS:
        wr, wi, br, bi = (np.asarray(t, np.float32) for t in params[name])
        if transpose:
            M, h, w = _dense_complex_conv_transpose2d(wr, wi, h, w, 2, 1)
        else:
            M, h, w = _dense_complex_conv2d(wr, wi, h, w, 2, 1)
        mats.append(jnp.asarray(M, jnp.bfloat16))
        biases.append(jnp.asarray(_dense_bias(br, bi, h, w)))
    return tuple(mats), tuple(biases)


# ----------------------------------------------------------------------------
# Deterministic parameter init (shapes match the PyTorch module __init__)
# ----------------------------------------------------------------------------
def _init_complex_conv(key, cin, cout, k, transpose=False):
    ks = jax.random.split(key, 4)
    fan_in = cin * k * k
    bound = 1.0 / math.sqrt(fan_in)
    wshape = (cin, cout, k, k) if transpose else (cout, cin, k, k)
    wr = jax.random.uniform(ks[0], wshape, jnp.float32, -bound, bound)
    wi = jax.random.uniform(ks[1], wshape, jnp.float32, -bound, bound)
    br = jax.random.uniform(ks[2], (cout,), jnp.float32, -bound, bound)
    bi = jax.random.uniform(ks[3], (cout,), jnp.float32, -bound, bound)
    return wr, wi, br, bi


def init_params(key):
    ks = jax.random.split(key, 6)
    return {
        "down1": _init_complex_conv(ks[0], 1, 4, 3),
        "down2": _init_complex_conv(ks[1], 4, 8, 3),
        "down3": _init_complex_conv(ks[2], 8, 16, 3),
        "up3": _init_complex_conv(ks[3], 16, 8, 4, transpose=True),
        "up2": _init_complex_conv(ks[4], 8, 4, 4, transpose=True),
        "up1": _init_complex_conv(ks[5], 4, 1, 4, transpose=True),
    }


# ----------------------------------------------------------------------------
# CCNN2 forward
# ----------------------------------------------------------------------------
def ccnn2_forward(xr, xi, mats, biases):
    B, C, H, W = xr.shape
    n = C * H * W
    # Ship the input as bf16: the MXU consumes bf16 operands anyway.
    x_flat = jnp.concatenate([xr.reshape(B, n), xi.reshape(B, n)],
                             axis=1).astype(jnp.bfloat16)
    out_flat = ccnn2_fused(x_flat, mats, biases)      # [B, 2*1*H*W] f32
    n_out = out_flat.shape[1] // 2
    out_r = out_flat[:, :n_out].reshape(B, 1, H, W)
    out_i = out_flat[:, n_out:].reshape(B, 1, H, W)
    # TODO(synk): final atan2 kept as a tiny XLA elementwise epilogue; Mosaic
    # atan2 lowering support varies across jax versions.
    return jnp.arctan2(out_i, out_r)


if __name__ == "__main__":
    key = jax.random.PRNGKey(0)
    kx, kp = jax.random.split(key)
    kxr, kxi = jax.random.split(kx)

    B, C, H, W = 2, 1, 16, 16                  # complex input x: [2, 1, 16, 16]
    xr = jax.random.normal(kxr, (B, C, H, W), jnp.float32)
    xi = jax.random.normal(kxi, (B, C, H, W), jnp.float32)

    params = init_params(kp)
    mats, biases = prepare_dense_params(params, H, W)

    fwd = jax.jit(ccnn2_forward)
    holophase = fwd(xr, xi, mats, biases)
    jax.block_until_ready(holophase)

    assert holophase.shape == (B, 1, H, W)
    assert holophase.dtype == jnp.float32
    assert bool(jnp.all(jnp.isfinite(holophase)))
    print("KERNEL_OK")
</pallas_src>

<mosaic_0001>
module attributes {stable_mosaic.version = 11 : i64} {
  func.func @_ccnn2_kernel(%arg0: i32, %arg1: memref<8x512xbf16, #tpu.memory_space<vmem>>, %arg2: memref<512x512xbf16, #tpu.memory_space<vmem>>, %arg3: memref<1x512xf32, #tpu.memory_space<vmem>>, %arg4: memref<512x256xbf16, #tpu.memory_space<vmem>>, %arg5: memref<1x256xf32, #tpu.memory_space<vmem>>, %arg6: memref<256x128xbf16, #tpu.memory_space<vmem>>, %arg7: memref<1x128xf32, #tpu.memory_space<vmem>>, %arg8: memref<128x256xbf16, #tpu.memory_space<vmem>>, %arg9: memref<1x256xf32, #tpu.memory_space<vmem>>, %arg10: memref<256x512xbf16, #tpu.memory_space<vmem>>, %arg11: memref<1x512xf32, #tpu.memory_space<vmem>>, %arg12: memref<512x512xbf16, #tpu.memory_space<vmem>>, %arg13: memref<1x512xf32, #tpu.memory_space<vmem>>, %arg14: memref<8x512xf32, #tpu.memory_space<vmem>>) attributes {dimension_semantics = [#tpu.dimension_semantics<parallel>], iteration_bounds = array<i64: 1>, scalar_prefetch = 0 : i64, scratch_operands = 0 : i64, tpu.core_type = #tpu.core_type<tc>, window_params = [{transform_indices = @transform_0, window_bounds = array<i64: 8, 512>}, {pipeline_mode = #tpu.pipeline_mode<synchronous>, transform_indices = @transform_1, window_bounds = array<i64: 512, 512>}, {pipeline_mode = #tpu.pipeline_mode<synchronous>, transform_indices = @transform_2, window_bounds = array<i64: 1, 512>}, {pipeline_mode = #tpu.pipeline_mode<synchronous>, transform_indices = @transform_3, window_bounds = array<i64: 512, 256>}, {pipeline_mode = #tpu.pipeline_mode<synchronous>, transform_indices = @transform_4, window_bounds = array<i64: 1, 256>}, {pipeline_mode = #tpu.pipeline_mode<synchronous>, transform_indices = @transform_5, window_bounds = array<i64: 256, 128>}, {pipeline_mode = #tpu.pipeline_mode<synchronous>, transform_indices = @transform_6, window_bounds = array<i64: 1, 128>}, {pipeline_mode = #tpu.pipeline_mode<synchronous>, transform_indices = @transform_7, window_bounds = array<i64: 128, 256>}, {pipeline_mode = #tpu.pipeline_mode<synchronous>, transform_indices = @transform_8, window_bounds = array<i64: 1, 256>}, {pipeline_mode = #tpu.pipeline_mode<synchronous>, transform_indices = @transform_9, window_bounds = array<i64: 256, 512>}, {pipeline_mode = #tpu.pipeline_mode<synchronous>, transform_indices = @transform_10, window_bounds = array<i64: 1, 512>}, {pipeline_mode = #tpu.pipeline_mode<synchronous>, transform_indices = @transform_11, window_bounds = array<i64: 512, 512>}, {pipeline_mode = #tpu.pipeline_mode<synchronous>, transform_indices = @transform_12, window_bounds = array<i64: 1, 512>}, {transform_indices = @transform_13, window_bounds = array<i64: 8, 512>}]} {
    %c0 = arith.constant 0 : index
    %c0_0 = arith.constant 0 : index
    %0 = vector.load %arg1[%c0, %c0_0] : memref<8x512xbf16, #tpu.memory_space<vmem>>, vector<8x512xbf16>
    %c0_1 = arith.constant 0 : index
    %c0_2 = arith.constant 0 : index
    %1 = vector.load %arg2[%c0_1, %c0_2] : memref<512x512xbf16, #tpu.memory_space<vmem>>, vector<512x512xbf16>
    %cst = arith.constant dense<0.000000e+00> : vector<8x512xf32>
    %2 = tpu.matmul %0, %1, %cst {dimension_numbers = #tpu.dot_dimension_numbers<[1], [0], [0], [1], [0, 0, 1, 1], [], []>} : vector<8x512xbf16>, vector<512x512xbf16>, vector<8x512xf32> -> vector<8x512xf32>
    %c0_3 = arith.constant 0 : index
    %c0_4 = arith.constant 0 : index
    %3 = vector.load %arg3[%c0_3, %c0_4] : memref<1x512xf32, #tpu.memory_space<vmem>>, vector<1x512xf32>
    %4 = vector.broadcast %3 : vector<1x512xf32> to vector<8x512xf32>
    %5 = arith.addf %2, %4 : vector<8x512xf32>
    %cst_5 = arith.constant 0.000000e+00 : f32
    %6 = vector.broadcast %cst_5 : f32 to vector<8x512xf32>
    %7 = arith.maximumf %5, %6 : vector<8x512xf32>
    %8 = arith.truncf %7 : vector<8x512xf32> to vector<8x512xbf16>
    %c0_6 = arith.constant 0 : index
    %c0_7 = arith.constant 0 : index
    %9 = vector.load %arg4[%c0_6, %c0_7] : memref<512x256xbf16, #tpu.memory_space<vmem>>, vector<512x256xbf16>
    %cst_8 = arith.constant dense<0.000000e+00> : vector<8x256xf32>
    %10 = tpu.matmul %8, %9, %cst_8 {dimension_numbers = #tpu.dot_dimension_numbers<[1], [0], [0], [1], [0, 0, 1, 1], [], []>} : vector<8x512xbf16>, vector<512x256xbf16>, vector<8x256xf32> -> vector<8x256xf32>
    %c0_9 = arith.constant 0 : index
    %c0_10 = arith.constant 0 : index
    %11 = vector.load %arg5[%c0_9, %c0_10] : memref<1x256xf32, #tpu.memory_space<vmem>>, vector<1x256xf32>
    %12 = vector.broadcast %11 : vector<1x256xf32> to vector<8x256xf32>
    %13 = arith.addf %10, %12 : vector<8x256xf32>
    %cst_11 = arith.constant 0.000000e+00 : f32
    %14 = vector.broadcast %cst_11 : f32 to vector<8x256xf32>
    %15 = arith.maximumf %13, %14 : vector<8x256xf32>
    %16 = arith.truncf %15 : vector<8x256xf32> to vector<8x256xbf16>
    %c0_12 = arith.constant 0 : index
    %c0_13 = arith.constant 0 : index
    %17 = vector.load %arg6[%c0_12, %c0_13] : memref<256x128xbf16, #tpu.memory_space<vmem>>, vector<256x128xbf16>
    %cst_14 = arith.constant dense<0.000000e+00> : vector<8x128xf32>
    %18 = tpu.matmul %16, %17, %cst_14 {dimension_numbers = #tpu.dot_dimension_numbers<[1], [0], [0], [1], [0, 0, 1, 1], [], []>} : vector<8x256xbf16>, vector<256x128xbf16>, vector<8x128xf32> -> vector<8x128xf32>
    %c0_15 = arith.constant 0 : index
    %c0_16 = arith.constant 0 : index
    %19 = vector.load %arg7[%c0_15, %c0_16] : memref<1x128xf32, #tpu.memory_space<vmem>>, vector<1x128xf32>
    %20 = vector.broadcast %19 : vector<1x128xf32> to vector<8x128xf32>
    %21 = arith.addf %18, %20 : vector<8x128xf32>
    %cst_17 = arith.constant 0.000000e+00 : f32
    %22 = vector.broadcast %cst_17 : f32 to vector<8x128xf32>
    %23 = arith.maximumf %21, %22 : vector<8x128xf32>
    %24 = arith.truncf %23 : vector<8x128xf32> to vector<8x128xbf16>
    %c0_18 = arith.constant 0 : index
    %c0_19 = arith.constant 0 : index
    %25 = vector.load %arg8[%c0_18, %c0_19] : memref<128x256xbf16, #tpu.memory_space<vmem>>, vector<128x256xbf16>
    %cst_20 = arith.constant dense<0.000000e+00> : vector<8x256xf32>
    %26 = tpu.matmul %24, %25, %cst_20 {dimension_numbers = #tpu.dot_dimension_numbers<[1], [0], [0], [1], [0, 0, 1, 1], [], []>} : vector<8x128xbf16>, vector<128x256xbf16>, vector<8x256xf32> -> vector<8x256xf32>
    %c0_21 = arith.constant 0 : index
    %c0_22 = arith.constant 0 : index
    %27 = vector.load %arg9[%c0_21, %c0_22] : memref<1x256xf32, #tpu.memory_space<vmem>>, vector<1x256xf32>
    %28 = vector.broadcast %27 : vector<1x256xf32> to vector<8x256xf32>
    %29 = arith.addf %26, %28 : vector<8x256xf32>
    %cst_23 = arith.constant 0.000000e+00 : f32
    %30 = vector.broadcast %cst_23 : f32 to vector<8x256xf32>
    %31 = arith.maximumf %29, %30 : vector<8x256xf32>
    %32 = arith.addf %31, %15 : vector<8x256xf32>
    %33 = arith.truncf %32 : vector<8x256xf32> to vector<8x256xbf16>
    %c0_24 = arith.constant 0 : index
    %c0_25 = arith.constant 0 : index
    %34 = vector.load %arg10[%c0_24, %c0_25] : memref<256x512xbf16, #tpu.memory_space<vmem>>, vector<256x512xbf16>
    %cst_26 = arith.constant dense<0.000000e+00> : vector<8x512xf32>
    %35 = tpu.matmul %33, %34, %cst_26 {dimension_numbers = #tpu.dot_dimension_numbers<[1], [0], [0], [1], [0, 0, 1, 1], [], []>} : vector<8x256xbf16>, vector<256x512xbf16>, vector<8x512xf32> -> vector<8x512xf32>
    %c0_27 = arith.constant 0 : index
    %c0_28 = arith.constant 0 : index
    %36 = vector.load %arg11[%c0_27, %c0_28] : memref<1x512xf32, #tpu.memory_space<vmem>>, vector<1x512xf32>
    %37 = vector.broadcast %36 : vector<1x512xf32> to vector<8x512xf32>
    %38 = arith.addf %35, %37 : vector<8x512xf32>
    %cst_29 = arith.constant 0.000000e+00 : f32
    %39 = vector.broadcast %cst_29 : f32 to vector<8x512xf32>
    %40 = arith.maximumf %38, %39 : vector<8x512xf32>
    %41 = arith.addf %40, %7 : vector<8x512xf32>
    %42 = arith.truncf %41 : vector<8x512xf32> to vector<8x512xbf16>
    %c0_30 = arith.constant 0 : index
    %c0_31 = arith.constant 0 : index
    %43 = vector.load %arg12[%c0_30, %c0_31] : memref<512x512xbf16, #tpu.memory_space<vmem>>, vector<512x512xbf16>
    %cst_32 = arith.constant dense<0.000000e+00> : vector<8x512xf32>
    %44 = tpu.matmul %42, %43, %cst_32 {dimension_numbers = #tpu.dot_dimension_numbers<[1], [0], [0], [1], [0, 0, 1, 1], [], []>} : vector<8x512xbf16>, vector<512x512xbf16>, vector<8x512xf32> -> vector<8x512xf32>
    %c0_33 = arith.constant 0 : index
    %c0_34 = arith.constant 0 : index
    %45 = vector.load %arg13[%c0_33, %c0_34] : memref<1x512xf32, #tpu.memory_space<vmem>>, vector<1x512xf32>
    %46 = vector.broadcast %45 : vector<1x512xf32> to vector<8x512xf32>
    %47 = arith.addf %44, %46 : vector<8x512xf32>
    %c0_35 = arith.constant 0 : index
    %c0_36 = arith.constant 0 : index
    %48 = vector.load %arg14[%c0_35, %c0_36] : memref<8x512xf32, #tpu.memory_space<vmem>>, vector<8x512xf32>
    tpu.vector_store %arg14[%c0_35, %c0_36], %47 {strides = array<i32>} : memref<8x512xf32, #tpu.memory_space<vmem>>, vector<8x512xf32>,
    return
  }
  func.func @transform_0(%arg0: i32) -> (i32, i32) {
    %c0_i32 = arith.constant 0 : i32
    %c0_i32_0 = arith.constant 0 : i32
    return %arg0, %c0_i32 : i32, i32
  }
  func.func @transform_1(%arg0: i32) -> (i32, i32) {
    %c0_i32 = arith.constant 0 : i32
    %c0_i32_0 = arith.constant 0 : i32
    %c0_i32_1 = arith.constant 0 : i32
    return %c0_i32, %c0_i32_0 : i32, i32
  }
  func.func @transform_2(%arg0: i32) -> (i32, i32) {
    %c0_i32 = arith.constant 0 : i32
    %c0_i32_0 = arith.constant 0 : i32
    %c0_i32_1 = arith.constant 0 : i32
    return %c0_i32, %c0_i32_0 : i32, i32
  }
  func.func @transform_3(%arg0: i32) -> (i32, i32) {
    %c0_i32 = arith.constant 0 : i32
    %c0_i32_0 = arith.constant 0 : i32
    %c0_i32_1 = arith.constant 0 : i32
    return %c0_i32, %c0_i32_0 : i32, i32
  }
  func.func @transform_4(%arg0: i32) -> (i32, i32) {
    %c0_i32 = arith.constant 0 : i32
    %c0_i32_0 = arith.constant 0 : i32
    %c0_i32_1 = arith.constant 0 : i32
    return %c0_i32, %c0_i32_0 : i32, i32
  }
  func.func @transform_5(%arg0: i32) -> (i32, i32) {
    %c0_i32 = arith.constant 0 : i32
    %c0_i32_0 = arith.constant 0 : i32
    %c0_i32_1 = arith.constant 0 : i32
    return %c0_i32, %c0_i32_0 : i32, i32
  }
  func.func @transform_6(%arg0: i32) -> (i32, i32) {
    %c0_i32 = arith.constant 0 : i32
    %c0_i32_0 = arith.constant 0 : i32
    %c0_i32_1 = arith.constant 0 : i32
    return %c0_i32, %c0_i32_0 : i32, i32
  }
  func.func @transform_7(%arg0: i32) -> (i32, i32) {
    %c0_i32 = arith.constant 0 : i32
    %c0_i32_0 = arith.constant 0 : i32
    %c0_i32_1 = arith.constant 0 : i32
    return %c0_i32, %c0_i32_0 : i32, i32
  }
  func.func @transform_8(%arg0: i32) -> (i32, i32) {
    %c0_i32 = arith.constant 0 : i32
    %c0_i32_0 = arith.constant 0 : i32
    %c0_i32_1 = arith.constant 0 : i32
    return %c0_i32, %c0_i32_0 : i32, i32
  }
  func.func @transform_9(%arg0: i32) -> (i32, i32) {
    %c0_i32 = arith.constant 0 : i32
    %c0_i32_0 = arith.constant 0 : i32
    %c0_i32_1 = arith.constant 0 : i32
    return %c0_i32, %c0_i32_0 : i32, i32
  }
  func.func @transform_10(%arg0: i32) -> (i32, i32) {
    %c0_i32 = arith.constant 0 : i32
    %c0_i32_0 = arith.constant 0 : i32
    %c0_i32_1 = arith.constant 0 : i32
    return %c0_i32, %c0_i32_0 : i32, i32
  }
  func.func @transform_11(%arg0: i32) -> (i32, i32) {
    %c0_i32 = arith.constant 0 : i32
    %c0_i32_0 = arith.constant 0 : i32
    %c0_i32_1 = arith.constant 0 : i32
    return %c0_i32, %c0_i32_0 : i32, i32
  }
  func.func @transform_12(%arg0: i32) -> (i32, i32) {
    %c0_i32 = arith.constant 0 : i32
    %c0_i32_0 = arith.constant 0 : i32
    %c0_i32_1 = arith.constant 0 : i32
    return %c0_i32, %c0_i32_0 : i32, i32
  }
  func.func @transform_13(%arg0: i32) -> (i32, i32) {
    %c0_i32 = arith.constant 0 : i32
    %c0_i32_0 = arith.constant 0 : i32
    return %arg0, %c0_i32 : i32, i32
  }
}

</mosaic_0001>

<llo_original>
// kernel: ccnn2_forward.1
$region0: #{ccnn2_forward.1}
  #allocation0 [shape = 'u32[]', space=smem, size = 0x4, offset = 0x4, fixed_abs, tag = 'smem constant byte address 0x4 - core index']
  #allocation1 [shape = 'u32[144,128]{1,0:T(1,128)}', space=vmem, size = 0x12000, scoped, tag = 'internal scratch']
  %s0 = inlined_call_operand.vmem [shape: bf16[8,512], index: 0, kind: input, shape index: {}]
  %s1 = inlined_call_operand.hbm [shape: bf16[512,512], index: 1, kind: input, shape index: {}]
  %s2 = inlined_call_operand.vmem [shape: f32[1,512], index: 2, kind: input, shape index: {}]
  %s3 = inlined_call_operand.hbm [shape: bf16[512,256], index: 3, kind: input, shape index: {}]
  %s4 = inlined_call_operand.vmem [shape: f32[1,256], index: 4, kind: input, shape index: {}]
  %s5 = inlined_call_operand.vmem [shape: bf16[256,128], index: 5, kind: input, shape index: {}]
  %s6 = inlined_call_operand.vmem [shape: f32[1,128], index: 6, kind: input, shape index: {}]
  %s7 = inlined_call_operand.hbm [shape: bf16[128,256], index: 7, kind: input, shape index: {}]
  %s8 = inlined_call_operand.vmem [shape: f32[1,256], index: 8, kind: input, shape index: {}]
  %s9 = inlined_call_operand.hbm [shape: bf16[256,512], index: 9, kind: input, shape index: {}]
  %s10 = inlined_call_operand.vmem [shape: f32[1,512], index: 10, kind: input, shape index: {}]
  %s11 = inlined_call_operand.hbm [shape: bf16[512,512], index: 11, kind: input, shape index: {}]
  %s12 = inlined_call_operand.vmem [shape: f32[1,512], index: 12, kind: input, shape index: {}]
  %s13 = inlined_call_operand.vmem [shape: f32[8,512], index: 13, kind: output, shape index: {}]
  %s14 = sld [smem:[#allocation0]]
  $region82: #{ccnn2_forward.1} parent=0
    _
  %s16 = ssub.s32 1, %s14
  %s17 = scalar_select 0, %s16, %s14
  $region1: #{ccnn2_forward.1} parent=0
    #allocation2 [shape = 'u8[524288]{0}', space=vmem, size = 0x80000, scoped, tag = 'input window, operand 1, single buffered']
    #allocation3 [shape = 's32[1]{0}', space=sflag, size = 0x4, scoped, tag = 'scoped memory for ccnn2_forward.1']
    #allocation4 [shape = 'u8[262144]{0}', space=vmem, size = 0x40000, scoped, tag = 'input window, operand 3, single buffered']
    #allocation5 [shape = 's32[1]{0}', space=sflag, size = 0x4, scoped, tag = 'scoped memory for ccnn2_forward.1']
    #allocation6 [shape = 'u8[65536]{0}', space=vmem, size = 0x10000, scoped, tag = 'input window, operand 7, single buffered']
    #allocation7 [shape = 'u8[262144]{0}', space=vmem, size = 0x40000, scoped, tag = 'input window, operand 9, single buffered']
    #allocation8 [shape = 's32[1]{0}', space=sflag, size = 0x4, scoped, tag = 'scoped memory for ccnn2_forward.1']
    #allocation9 [shape = 'u8[524288]{0}', space=vmem, size = 0x80000, scoped, tag = 'input window, operand 11, single buffered']
    %18 = vsyncpa [#allocation3], 0
    %19 = vsyncpa [#allocation5], 0
    %20 = vsyncpa [#allocation8], 0
    // Predicated region
    $region2: #{ccnn2_forward.1} parent=1 // pred_check
      _
    $region3: #{ccnn2_forward.1} parent=1 // pred_check_branch
      %22 = sbr.rel (0) target = $region5
    $region4: #{ccnn2_forward.1} parent=1 // pred_region
      _
    $region5: #{ccnn2_forward.1} parent=1 // pred_fallthru
      _
    // Predicated region
    $region6: #{ccnn2_forward.1} parent=1 // pred_check
      _
    $region7: #{ccnn2_forward.1} parent=1 // pred_check_branch
      %24 = sbr.rel (0) target = $region9
    $region8: #{ccnn2_forward.1} parent=1 // pred_region
      %s26 = ssub.s32 16384, 16384
      %27 = vsyncadd [#allocation3], %s26
      %s28 = sshll.u32 [#allocation2], 4
      %s29 = int_to_ptr.vmem [resolvable:$true] %s28
      %34 = dma.hbm_to_vmem [thread:$0]  %s1, 16384, %s29, [#allocation3], 256, 256, 16
    $region9: #{ccnn2_forward.1} parent=1 // pred_fallthru
      _
    // Predicated region
    $region10: #{ccnn2_forward.1} parent=1 // pred_check
      _
    $region11: #{ccnn2_forward.1} parent=1 // pred_check_branch
      %36 = sbr.rel (0) target = $region13
    $region12: #{ccnn2_forward.1} parent=1 // pred_region
      _
    $region13: #{ccnn2_forward.1} parent=1 // pred_fallthru
      _
    // Predicated region
    $region14: #{ccnn2_forward.1} parent=1 // pred_check
      _
    $region15: #{ccnn2_forward.1} parent=1 // pred_check_branch
      %38 = sbr.rel (0) target = $region17
    $region16: #{ccnn2_forward.1} parent=1 // pred_region
      %s40 = ssub.s32 8192, 8192
      %41 = vsyncadd [#allocation5], %s40
      %s42 = sshll.u32 [#allocation4], 4
      %s43 = int_to_ptr.vmem [resolvable:$true] %s42
      %48 = dma.hbm_to_vmem [thread:$0]  %s3, 8192, %s43, [#allocation5], 128, 128, 8
    $region17: #{ccnn2_forward.1} parent=1 // pred_fallthru
      _
    // Predicated region
    $region18: #{ccnn2_forward.1} parent=1 // pred_check
      _
    $region19: #{ccnn2_forward.1} parent=1 // pred_check_branch
      %50 = sbr.rel (0) target = $region21
    $region20: #{ccnn2_forward.1} parent=1 // pred_region
      _
    $region21: #{ccnn2_forward.1} parent=1 // pred_fallthru
      _
    // Predicated region
    $region22: #{ccnn2_forward.1} parent=1 // pred_check
      _
    $region23: #{ccnn2_forward.1} parent=1 // pred_check_branch
      %52 = sbr.rel (0) target = $region25
    $region24: #{ccnn2_forward.1} parent=1 // pred_region
      _
    $region25: #{ccnn2_forward.1} parent=1 // pred_fallthru
      _
    // Predicated region
    $region26: #{ccnn2_forward.1} parent=1 // pred_check
      _
    $region27: #{ccnn2_forward.1} parent=1 // pred_check_branch
      %54 = sbr.rel (0) target = $region29
    $region28: #{ccnn2_forward.1} parent=1 // pred_region
      _
    $region29: #{ccnn2_forward.1} parent=1 // pred_fallthru
      _
    // Predicated region
    $region30: #{ccnn2_forward.1} parent=1 // pred_check
      _
    $region31: #{ccnn2_forward.1} parent=1 // pred_check_branch
      %56 = sbr.rel (0) target = $region33
    $region32: #{ccnn2_forward.1} parent=1 // pred_region
      %s58 = ssub.s32 2048, 2048
      %59 = vsyncadd [#allocation5], %s58
      %s60 = sshll.u32 [#allocation6], 4
      %s61 = int_to_ptr.vmem [resolvable:$true] %s60
      %66 = dma.hbm_to_vmem [thread:$0]  %s7, 2048, %s61, [#allocation5], 128, 128, 8
    $region33: #{ccnn2_forward.1} parent=1 // pred_fallthru
      _
    // Predicated region
    $region34: #{ccnn2_forward.1} parent=1 // pred_check
      _
    $region35: #{ccnn2_forward.1} parent=1 // pred_check_branch
      %68 = sbr.rel (0) target = $region37
    $region36: #{ccnn2_forward.1} parent=1 // pred_region
      _
    $region37: #{ccnn2_forward.1} parent=1 // pred_fallthru
      _
    // Predicated region
    $region38: #{ccnn2_forward.1} parent=1 // pred_check
      _
    $region39: #{ccnn2_forward.1} parent=1 // pred_check_branch
      %70 = sbr.rel (0) target = $region41
    $region40: #{ccnn2_forward.1} parent=1 // pred_region
      %s72 = ssub.s32 8192, 8192
      %73 = vsyncadd [#allocation8], %s72
      %s74 = sshll.u32 [#allocation7], 4
      %s75 = int_to_ptr.vmem [resolvable:$true] %s74
      %80 = dma.hbm_to_vmem [thread:$0]  %s9, 8192, %s75, [#allocation8], 256, 256, 16
    $region41: #{ccnn2_forward.1} parent=1 // pred_fallthru
      _
    // Predicated region
    $region42: #{ccnn2_forward.1} parent=1 // pred_check
      _
    $region43: #{ccnn2_forward.1} parent=1 // pred_check_branch
      %82 = sbr.rel (0) target = $region45
    $region44: #{ccnn2_forward.1} parent=1 // pred_region
      _
    $region45: #{ccnn2_forward.1} parent=1 // pred_fallthru
      _
    // Predicated region
    $region46: #{ccnn2_forward.1} parent=1 // pred_check
      _
    $region47: #{ccnn2_forward.1} parent=1 // pred_check_branch
      %84 = sbr.rel (0) target = $region49
    $region48: #{ccnn2_forward.1} parent=1 // pred_region
      %s86 = ssub.s32 16384, 16384
      %87 = vsyncadd [#allocation8], %s86
      %s88 = sshll.u32 [#allocation9], 4
      %s89 = int_to_ptr.vmem [resolvable:$true] %s88
      %94 = dma.hbm_to_vmem [thread:$0]  %s11, 16384, %s89, [#allocation8], 256, 256, 16
    $region49: #{ccnn2_forward.1} parent=1 // pred_fallthru
      _
    // Predicated region
    $region50: #{ccnn2_forward.1} parent=1 // pred_check
      _
    $region51: #{ccnn2_forward.1} parent=1 // pred_check_branch
      %96 = sbr.rel (0) target = $region53
    $region52: #{ccnn2_forward.1} parent=1 // pred_region
      _
    $region53: #{ccnn2_forward.1} parent=1 // pred_fallthru
      _
    // Predicated region
    $region54: #{ccnn2_forward.1} parent=1 // pred_check
      _
    $region55: #{ccnn2_forward.1} parent=1 // pred_check_branch
      %98 = sbr.rel (0) target = $region57
    $region56: #{ccnn2_forward.1} parent=1 // pred_region
      %99 = dma.done [#allocation3], 16384
    $region57: #{ccnn2_forward.1} parent=1 // pred_fallthru
      _
    // Predicated region
    $region58: #{ccnn2_forward.1} parent=1 // pred_check
      _
    $region59: #{ccnn2_forward.1} parent=1 // pred_check_branch
      %101 = sbr.rel (0) target = $region61
    $region60: #{ccnn2_forward.1} parent=1 // pred_region
      %102 = dma.done [#allocation5], 8192
    $region61: #{ccnn2_forward.1} parent=1 // pred_fallthru
      _
    // Predicated region
    $region62: #{ccnn2_forward.1} parent=1 // pred_check
      _
    $region63: #{ccnn2_forward.1} parent=1 // pred_check_branch
      %104 = sbr.rel (0) target = $region65
    $region64: #{ccnn2_forward.1} parent=1 // pred_region
      %105 = dma.done [#allocation5], 2048
    $region65: #{ccnn2_forward.1} parent=1 // pred_fallthru
      _
    // Predicated region
    $region66: #{ccnn2_forward.1} parent=1 // pred_check
      _
    $region67: #{ccnn2_forward.1} parent=1 // pred_check_branch
      %107 = sbr.rel (0) target = $region69
    $region68: #{ccnn2_forward.1} parent=1 // pred_region
      %108 = dma.done [#allocation8], 8192
    $region69: #{ccnn2_forward.1} parent=1 // pred_fallthru
      _
    // Predicated region
    $region70: #{ccnn2_forward.1} parent=1 // pred_check
      _
    $region71: #{ccnn2_forward.1} parent=1 // pred_check_branch
      %110 = sbr.rel (0) target = $region73
    $region72: #{ccnn2_forward.1} parent=1 // pred_region
      %111 = dma.done [#allocation8], 16384
    $region73: #{ccnn2_forward.1} parent=1 // pred_fallthru
      _
    %v113 = vld [vmem:[%s0] sm:$0xff]
    %v114 = vld [vmem:[%s0 + $0x8] sm:$0xff]
    %v115 = vld [vmem:[#allocation2] sm:$0xff]
    %v116 = vld [vmem:[#allocation2 + $0x8] sm:$0xff]
    %v117 = vld [vmem:[#allocation2 + $0x10] sm:$0xff]
    %v118 = vld [vmem:[#allocation2 + $0x18] sm:$0xff]
    %v119 = vld [vmem:[#allocation2 + $0x20] sm:$0xff]
    %v120 = vld [vmem:[#allocation2 + $0x28] sm:$0xff]
    %v121 = vld [vmem:[#allocation2 + $0x30] sm:$0xff]
    %v122 = vld [vmem:[#allocation2 + $0x38] sm:$0xff]
    %v123 = vld [vmem:[#allocation2 + $0x40] sm:$0xff]
    %v124 = vld [vmem:[#allocation2 + $0x48] sm:$0xff]
    %v125 = vld [vmem:[#allocation2 + $0x50] sm:$0xff]
    %v126 = vld [vmem:[#allocation2 + $0x58] sm:$0xff]
    %v127 = vld [vmem:[#allocation2 + $0x60] sm:$0xff]
    %v128 = vld [vmem:[#allocation2 + $0x68] sm:$0xff]
    %v129 = vld [vmem:[#allocation2 + $0x70] sm:$0xff]
    %v130 = vld [vmem:[#allocation2 + $0x78] sm:$0xff]
    %v131 = vld [vmem:[#allocation2 + $0x80] sm:$0xff]
    %v132 = vld [vmem:[#allocation2 + $0x88] sm:$0xff]
    %v133 = vld [vmem:[#allocation2 + $0x90] sm:$0xff]
    %v134 = vld [vmem:[#allocation2 + $0x98] sm:$0xff]
    %v135 = vld [vmem:[#allocation2 + $0xa0] sm:$0xff]
    %v136 = vld [vmem:[#allocation2 + $0xa8] sm:$0xff]
    %v137 = vld [vmem:[#allocation2 + $0xb0] sm:$0xff]
    %v138 = vld [vmem:[#allocation2 + $0xb8] sm:$0xff]
    %v139 = vld [vmem:[#allocation2 + $0xc0] sm:$0xff]
    %v140 = vld [vmem:[#allocation2 + $0xc8] sm:$0xff]
    %v141 = vld [vmem:[#allocation2 + $0xd0] sm:$0xff]
    %v142 = vld [vmem:[#allocation2 + $0xd8] sm:$0xff]
    %v143 = vld [vmem:[#allocation2 + $0xe0] sm:$0xff]
    %v144 = vld [vmem:[#allocation2 + $0xe8] sm:$0xff]
    %v145 = vld [vmem:[#allocation2 + $0xf0] sm:$0xff]
    %v146 = vld [vmem:[#allocation2 + $0xf8] sm:$0xff]
    %v147 = vld [vmem:[#allocation2 + $0x100] sm:$0xff]
    %v148 = vld [vmem:[#allocation2 + $0x108] sm:$0xff]
    %v149 = vld [vmem:[#allocation2 + $0x110] sm:$0xff]
    %v150 = vld [vmem:[#allocation2 + $0x118] sm:$0xff]
    %v151 = vld [vmem:[#allocation2 + $0x120] sm:$0xff]
    %v152 = vld [vmem:[#allocation2 + $0x128] sm:$0xff]
    %v153 = vld [vmem:[#allocation2 + $0x130] sm:$0xff]
    %v154 = vld [vmem:[#allocation2 + $0x138] sm:$0xff]
    %v155 = vld [vmem:[#allocation2 + $0x140] sm:$0xff]
    %v156 = vld [vmem:[#allocation2 + $0x148] sm:$0xff]
    %v157 = vld [vmem:[#allocation2 + $0x150] sm:$0xff]
    %v158 = vld [vmem:[#allocation2 + $0x158] sm:$0xff]
    %v159 = vld [vmem:[#allocation2 + $0x160] sm:$0xff]
    %v160 = vld [vmem:[#allocation2 + $0x168] sm:$0xff]
    %v161 = vld [vmem:[#allocation2 + $0x170] sm:$0xff]
    %v162 = vld [vmem:[#allocation2 + $0x178] sm:$0xff]
    %v163 = vld [vmem:[#allocation2 + $0x180] sm:$0xff]
    %v164 = vld [vmem:[#allocation2 + $0x188] sm:$0xff]
    %v165 = vld [vmem:[#allocation2 + $0x190] sm:$0xff]
    %v166 = vld [vmem:[#allocation2 + $0x198] sm:$0xff]
    %v167 = vld [vmem:[#allocation2 + $0x1a0] sm:$0xff]
    %v168 = vld [vmem:[#allocation2 + $0x1a8] sm:$0xff]
    %v169 = vld [vmem:[#allocation2 + $0x1b0] sm:$0xff]
    %v170 = vld [vmem:[#allocation2 + $0x1b8] sm:$0xff]
    %v171 = vld [vmem:[#allocation2 + $0x1c0] sm:$0xff]
    %v172 = vld [vmem:[#allocation2 + $0x1c8] sm:$0xff]
    %v173 = vld [vmem:[#allocation2 + $0x1d0] sm:$0xff]
    %v174 = vld [vmem:[#allocation2 + $0x1d8] sm:$0xff]
    %v175 = vld [vmem:[#allocation2 + $0x1e0] sm:$0xff]
    %v176 = vld [vmem:[#allocation2 + $0x1e8] sm:$0xff]
    %v177 = vld [vmem:[#allocation2 + $0x1f0] sm:$0xff]
    %v178 = vld [vmem:[#allocation2 + $0x1f8] sm:$0xff]
    %v179 = vld [vmem:[#allocation2 + $0x200] sm:$0xff]
    %v180 = vld [vmem:[#allocation2 + $0x208] sm:$0xff]
    %v181 = vld [vmem:[#allocation2 + $0x210] sm:$0xff]
    %v182 = vld [vmem:[#allocation2 + $0x218] sm:$0xff]
    %v183 = vld [vmem:[#allocation2 + $0x220] sm:$0xff]
    %v184 = vld [vmem:[#allocation2 + $0x228] sm:$0xff]
    %v185 = vld [vmem:[#allocation2 + $0x230] sm:$0xff]
    %v186 = vld [vmem:[#allocation2 + $0x238] sm:$0xff]
    %v187 = vld [vmem:[#allocation2 + $0x240] sm:$0xff]
    %v188 = vld [vmem:[#allocation2 + $0x248] sm:$0xff]
    %v189 = vld [vmem:[#allocation2 + $0x250] sm:$0xff]
    %v190 = vld [vmem:[#allocation2 + $0x258] sm:$0xff]
    %v191 = vld [vmem:[#allocation2 + $0x260] sm:$0xff]
    %v192 = vld [vmem:[#allocation2 + $0x268] sm:$0xff]
    %v193 = vld [vmem:[#allocation2 + $0x270] sm:$0xff]
    %v194 = vld [vmem:[#allocation2 + $0x278] sm:$0xff]
    %v195 = vld [vmem:[#allocation2 + $0x280] sm:$0xff]
    %v196 = vld [vmem:[#allocation2 + $0x288] sm:$0xff]
    %v197 = vld [vmem:[#allocation2 + $0x290] sm:$0xff]
    %v198 = vld [vmem:[#allocation2 + $0x298] sm:$0xff]
    %v199 = vld [vmem:[#allocation2 + $0x2a0] sm:$0xff]
    %v200 = vld [vmem:[#allocation2 + $0x2a8] sm:$0xff]
    %v201 = vld [vmem:[#allocation2 + $0x2b0] sm:$0xff]
    %v202 = vld [vmem:[#allocation2 + $0x2b8] sm:$0xff]
    %v203 = vld [vmem:[#allocation2 + $0x2c0] sm:$0xff]
    %v204 = vld [vmem:[#allocation2 + $0x2c8] sm:$0xff]
    %v205 = vld [vmem:[#allocation2 + $0x2d0] sm:$0xff]
    %v206 = vld [vmem:[#allocation2 + $0x2d8] sm:$0xff]
    %v207 = vld [vmem:[#allocation2 + $0x2e0] sm:$0xff]
    %v208 = vld [vmem:[#allocation2 + $0x2e8] sm:$0xff]
    %v209 = vld [vmem:[#allocation2 + $0x2f0] sm:$0xff]
    %v210 = vld [vmem:[#allocation2 + $0x2f8] sm:$0xff]
    %v211 = vld [vmem:[#allocation2 + $0x300] sm:$0xff]
    %v212 = vld [vmem:[#allocation2 + $0x308] sm:$0xff]
    %v213 = vld [vmem:[#allocation2 + $0x310] sm:$0xff]
    %v214 = vld [vmem:[#allocation2 + $0x318] sm:$0xff]
    %v215 = vld [vmem:[#allocation2 + $0x320] sm:$0xff]
    %v216 = vld [vmem:[#allocation2 + $0x328] sm:$0xff]
    %v217 = vld [vmem:[#allocation2 + $0x330] sm:$0xff]
    %v218 = vld [vmem:[#allocation2 + $0x338] sm:$0xff]
    %v219 = vld [vmem:[#allocation2 + $0x340] sm:$0xff]
    %v220 = vld [vmem:[#allocation2 + $0x348] sm:$0xff]
    %v221 = vld [vmem:[#allocation2 + $0x350] sm:$0xff]
    %v222 = vld [vmem:[#allocation2 + $0x358] sm:$0xff]
    %v223 = vld [vmem:[#allocation2 + $0x360] sm:$0xff]
    %v224 = vld [vmem:[#allocation2 + $0x368] sm:$0xff]
    %v225 = vld [vmem:[#allocation2 + $0x370] sm:$0xff]
    %v226 = vld [vmem:[#allocation2 + $0x378] sm:$0xff]
    %v227 = vld [vmem:[#allocation2 + $0x380] sm:$0xff]
    %v228 = vld [vmem:[#allocation2 + $0x388] sm:$0xff]
    %v229 = vld [vmem:[#allocation2 + $0x390] sm:$0xff]
    %v230 = vld [vmem:[#allocation2 + $0x398] sm:$0xff]
    %v231 = vld [vmem:[#allocation2 + $0x3a0] sm:$0xff]
    %v232 = vld [vmem:[#allocation2 + $0x3a8] sm:$0xff]
    %v233 = vld [vmem:[#allocation2 + $0x3b0] sm:$0xff]
    %v234 = vld [vmem:[#allocation2 + $0x3b8] sm:$0xff]
    %v235 = vld [vmem:[#allocation2 + $0x3c0] sm:$0xff]
    %v236 = vld [vmem:[#allocation2 + $0x3c8] sm:$0xff]
    %v237 = vld [vmem:[#allocation2 + $0x3d0] sm:$0xff]
    %v238 = vld [vmem:[#allocation2 + $0x3d8] sm:$0xff]
    %v239 = vld [vmem:[#allocation2 + $0x3e0] sm:$0xff]
    %v240 = vld [vmem:[#allocation2 + $0x3e8] sm:$0xff]
    %v241 = vld [vmem:[#allocation2 + $0x3f0] sm:$0xff]
    %v242 = vld [vmem:[#allocation2 + $0x3f8] sm:$0xff]
    %v243 = vld [vmem:[%s2] sm:$0xf]
    %v245 = vlaneseq
    %v246 = vshrl.u32 %v245, 7
    %v247 = vsub.s32 0, %v246
    %v248 = vrot.slane %v243, %v247
    %v249 = vlaneseq
    %v250 = vshrl.u32 %v249, 7
    %v251 = vsub.s32 1, %v250
    %v252 = vrot.slane %v243, %v251
    %v253 = vlaneseq
    %v254 = vshrl.u32 %v253, 7
    %v255 = vsub.s32 2, %v254
    %v256 = vrot.slane %v243, %v255
    %v257 = vlaneseq
    %v258 = vshrl.u32 %v257, 7
    %v259 = vsub.s32 3, %v258
    %v260 = vrot.slane %v243, %v259
    %v267 = vunpack.c.l.b16 %v113
    %v268 = vunpack.c.h.b16 %v113
    %v269 = vunpack.c.l.b16 %v114
    %v270 = vunpack.c.h.b16 %v114
    %v271 = vpack.c.b16 %v267, %v267
    %v272 = vpack.c.b16 %v268, %v268
    %v273 = vpack.c.b16 %v269, %v269
    %v274 = vpack.c.b16 %v270, %v270
    %v407 = vunpack.c.l.b16 %v115
    %v408 = vunpack.c.h.b16 %v115
    %v409 = vunpack.c.l.b16 %v116
    %v410 = vunpack.c.h.b16 %v116
    %v411 = vunpack.c.l.b16 %v117
    %v412 = vunpack.c.h.b16 %v117
    %v413 = vunpack.c.l.b16 %v118
    %v414 = vunpack.c.h.b16 %v118
    %v415 = vunpack.c.l.b16 %v119
    %v416 = vunpack.c.h.b16 %v119
    %v417 = vunpack.c.l.b16 %v120
    %v418 = vunpack.c.h.b16 %v120
    %v419 = vunpack.c.l.b16 %v121
    %v420 = vunpack.c.h.b16 %v121
    %v421 = vunpack.c.l.b16 %v122
    %v422 = vunpack.c.h.b16 %v122
    %v423 = vunpack.c.l.b16 %v123
    %v424 = vunpack.c.h.b16 %v123
    %v425 = vunpack.c.l.b16 %v124
    %v426 = vunpack.c.h.b16 %v124
    %v427 = vunpack.c.l.b16 %v125
    %v428 = vunpack.c.h.b16 %v125
    %v429 = vunpack.c.l.b16 %v126
    %v430 = vunpack.c.h.b16 %v126
    %v431 = vunpack.c.l.b16 %v127
    %v432 = vunpack.c.h.b16 %v127
    %v433 = vunpack.c.l.b16 %v128
    %v434 = vunpack.c.h.b16 %v128
    %v435 = vunpack.c.l.b16 %v129
    %v436 = vunpack.c.h.b16 %v129
    %v437 = vunpack.c.l.b16 %v130
    %v438 = vunpack.c.h.b16 %v130
    %v439 = vunpack.c.l.b16 %v131
    %v440 = vunpack.c.h.b16 %v131
    %v441 = vunpack.c.l.b16 %v132
    %v442 = vunpack.c.h.b16 %v132
    %v443 = vunpack.c.l.b16 %v133
    %v444 = vunpack.c.h.b16 %v133
    %v445 = vunpack.c.l.b16 %v134
    %v446 = vunpack.c.h.b16 %v134
    %v447 = vunpack.c.l.b16 %v135
    %v448 = vunpack.c.h.b16 %v135
    %v449 = vunpack.c.l.b16 %v136
    %v450 = vunpack.c.h.b16 %v136
    %v451 = vunpack.c.l.b16 %v137
    %v452 = vunpack.c.h.b16 %v137
    %v453 = vunpack.c.l.b16 %v138
    %v454 = vunpack.c.h.b16 %v138
    %v455 = vunpack.c.l.b16 %v139
    %v456 = vunpack.c.h.b16 %v139
    %v457 = vunpack.c.l.b16 %v140
    %v458 = vunpack.c.h.b16 %v140
    %v459 = vunpack.c.l.b16 %v141
    %v460 = vunpack.c.h.b16 %v141
    %v461 = vunpack.c.l.b16 %v142
    %v462 = vunpack.c.h.b16 %v142
    %v463 = vunpack.c.l.b16 %v143
    %v464 = vunpack.c.h.b16 %v143
    %v465 = vunpack.c.l.b16 %v144
    %v466 = vunpack.c.h.b16 %v144
    %v467 = vunpack.c.l.b16 %v145
    %v468 = vunpack.c.h.b16 %v145
    %v469 = vunpack.c.l.b16 %v146
    %v470 = vunpack.c.h.b16 %v146
    %v471 = vunpack.c.l.b16 %v147
    %v472 = vunpack.c.h.b16 %v147
    %v473 = vunpack.c.l.b16 %v148
    %v474 = vunpack.c.h.b16 %v148
    %v475 = vunpack.c.l.b16 %v149
    %v476 = vunpack.c.h.b16 %v149
    %v477 = vunpack.c.l.b16 %v150
    %v478 = vunpack.c.h.b16 %v150
    %v479 = vunpack.c.l.b16 %v151
    %v480 = vunpack.c.h.b16 %v151
    %v481 = vunpack.c.l.b16 %v152
    %v482 = vunpack.c.h.b16 %v152
    %v483 = vunpack.c.l.b16 %v153
    %v484 = vunpack.c.h.b16 %v153
    %v485 = vunpack.c.l.b16 %v154
    %v486 = vunpack.c.h.b16 %v154
    %v487 = vunpack.c.l.b16 %v155
    %v488 = vunpack.c.h.b16 %v155
    %v489 = vunpack.c.l.b16 %v156
    %v490 = vunpack.c.h.b16 %v156
    %v491 = vunpack.c.l.b16 %v157
    %v492 = vunpack.c.h.b16 %v157
    %v493 = vunpack.c.l.b16 %v158
    %v494 = vunpack.c.h.b16 %v158
    %v495 = vunpack.c.l.b16 %v159
    %v496 = vunpack.c.h.b16 %v159
    %v497 = vunpack.c.l.b16 %v160
    %v498 = vunpack.c.h.b16 %v160
    %v499 = vunpack.c.l.b16 %v161
    %v500 = vunpack.c.h.b16 %v161
    %v501 = vunpack.c.l.b16 %v162
    %v502 = vunpack.c.h.b16 %v162
    %v503 = vunpack.c.l.b16 %v163
    %v504 = vunpack.c.h.b16 %v163
    %v505 = vunpack.c.l.b16 %v164
    %v506 = vunpack.c.h.b16 %v164
    %v507 = vunpack.c.l.b16 %v165
    %v508 = vunpack.c.h.b16 %v165
    %v509 = vunpack.c.l.b16 %v166
    %v510 = vunpack.c.h.b16 %v166
    %v511 = vunpack.c.l.b16 %v167
    %v512 = vunpack.c.h.b16 %v167
    %v513 = vunpack.c.l.b16 %v168
    %v514 = vunpack.c.h.b16 %v168
    %v515 = vunpack.c.l.b16 %v169
    %v516 = vunpack.c.h.b16 %v169
    %v517 = vunpack.c.l.b16 %v170
    %v518 = vunpack.c.h.b16 %v170
    %v519 = vunpack.c.l.b16 %v171
    %v520 = vunpack.c.h.b16 %v171
    %v521 = vunpack.c.l.b16 %v172
    %v522 = vunpack.c.h.b16 %v172
    %v523 = vunpack.c.l.b16 %v173
    %v524 = vunpack.c.h.b16 %v173
    %v525 = vunpack.c.l.b16 %v174
    %v526 = vunpack.c.h.b16 %v174
    %v527 = vunpack.c.l.b16 %v175
    %v528 = vunpack.c.h.b16 %v175
    %v529 = vunpack.c.l.b16 %v176
    %v530 = vunpack.c.h.b16 %v176
    %v531 = vunpack.c.l.b16 %v177
    %v532 = vunpack.c.h.b16 %v177
    %v533 = vunpack.c.l.b16 %v178
    %v534 = vunpack.c.h.b16 %v178
    %v535 = vunpack.c.l.b16 %v179
    %v536 = vunpack.c.h.b16 %v179
    %v537 = vunpack.c.l.b16 %v180
    %v538 = vunpack.c.h.b16 %v180
    %v539 = vunpack.c.l.b16 %v181
    %v540 = vunpack.c.h.b16 %v181
    %v541 = vunpack.c.l.b16 %v182
    %v542 = vunpack.c.h.b16 %v182
    %v543 = vunpack.c.l.b16 %v183
    %v544 = vunpack.c.h.b16 %v183
    %v545 = vunpack.c.l.b16 %v184
    %v546 = vunpack.c.h.b16 %v184
    %v547 = vunpack.c.l.b16 %v185
    %v548 = vunpack.c.h.b16 %v185
    %v549 = vunpack.c.l.b16 %v186
    %v550 = vunpack.c.h.b16 %v186
    %v551 = vunpack.c.l.b16 %v187
    %v552 = vunpack.c.h.b16 %v187
    %v553 = vunpack.c.l.b16 %v188
    %v554 = vunpack.c.h.b16 %v188
    %v555 = vunpack.c.l.b16 %v189
    %v556 = vunpack.c.h.b16 %v189
    %v557 = vunpack.c.l.b16 %v190
    %v558 = vunpack.c.h.b16 %v190
    %v559 = vunpack.c.l.b16 %v191
    %v560 = vunpack.c.h.b16 %v191
    %v561 = vunpack.c.l.b16 %v192
    %v562 = vunpack.c.h.b16 %v192
    %v563 = vunpack.c.l.b16 %v193
    %v564 = vunpack.c.h.b16 %v193
    %v565 = vunpack.c.l.b16 %v194
    %v566 = vunpack.c.h.b16 %v194
    %v567 = vunpack.c.l.b16 %v195
    %v568 = vunpack.c.h.b16 %v195
    %v569 = vunpack.c.l.b16 %v196
    %v570 = vunpack.c.h.b16 %v196
    %v571 = vunpack.c.l.b16 %v197
    %v572 = vunpack.c.h.b16 %v197
    %v573 = vunpack.c.l.b16 %v198
    %v574 = vunpack.c.h.b16 %v198
    %v575 = vunpack.c.l.b16 %v199
    %v576 = vunpack.c.h.b16 %v199
    %v577 = vunpack.c.l.b16 %v200
    %v578 = vunpack.c.h.b16 %v200
    %v579 = vunpack.c.l.b16 %v201
    %v580 = vunpack.c.h.b16 %v201
    %v581 = vunpack.c.l.b16 %v202
    %v582 = vunpack.c.h.b16 %v202
    %v583 = vunpack.c.l.b16 %v203
    %v584 = vunpack.c.h.b16 %v203
    %v585 = vunpack.c.l.b16 %v204
    %v586 = vunpack.c.h.b16 %v204
    %v587 = vunpack.c.l.b16 %v205
    %v588 = vunpack.c.h.b16 %v205
    %v589 = vunpack.c.l.b16 %v206
    %v590 = vunpack.c.h.b16 %v206
    %v591 = vunpack.c.l.b16 %v207
    %v592 = vunpack.c.h.b16 %v207
    %v593 = vunpack.c.l.b16 %v208
    %v594 = vunpack.c.h.b16 %v208
    %v595 = vunpack.c.l.b16 %v209
    %v596 = vunpack.c.h.b16 %v209
    %v597 = vunpack.c.l.b16 %v210
    %v598 = vunpack.c.h.b16 %v210
    %v599 = vunpack.c.l.b16 %v211
    %v600 = vunpack.c.h.b16 %v211
    %v601 = vunpack.c.l.b16 %v212
    %v602 = vunpack.c.h.b16 %v212
    %v603 = vunpack.c.l.b16 %v213
    %v604 = vunpack.c.h.b16 %v213
    %v605 = vunpack.c.l.b16 %v214
    %v606 = vunpack.c.h.b16 %v214
    %v607 = vunpack.c.l.b16 %v215
    %v608 = vunpack.c.h.b16 %v215
    %v609 = vunpack.c.l.b16 %v216
    %v610 = vunpack.c.h.b16 %v216
    %v611 = vunpack.c.l.b16 %v217
    %v612 = vunpack.c.h.b16 %v217
    %v613 = vunpack.c.l.b16 %v218
    %v614 = vunpack.c.h.b16 %v218
    %v615 = vunpack.c.l.b16 %v219
    %v616 = vunpack.c.h.b16 %v219
    %v617 = vunpack.c.l.b16 %v220
    %v618 = vunpack.c.h.b16 %v220
    %v619 = vunpack.c.l.b16 %v221
    %v620 = vunpack.c.h.b16 %v221
    %v621 = vunpack.c.l.b16 %v222
    %v622 = vunpack.c.h.b16 %v222
    %v623 = vunpack.c.l.b16 %v223
    %v624 = vunpack.c.h.b16 %v223
    %v625 = vunpack.c.l.b16 %v224
    %v626 = vunpack.c.h.b16 %v224
    %v627 = vunpack.c.l.b16 %v225
    %v628 = vunpack.c.h.b16 %v225
    %v629 = vunpack.c.l.b16 %v226
    %v630 = vunpack.c.h.b16 %v226
    %v631 = vunpack.c.l.b16 %v227
    %v632 = vunpack.c.h.b16 %v227
    %v633 = vunpack.c.l.b16 %v228
    %v634 = vunpack.c.h.b16 %v228
    %v635 = vunpack.c.l.b16 %v229
    %v636 = vunpack.c.h.b16 %v229
    %v637 = vunpack.c.l.b16 %v230
    %v638 = vunpack.c.h.b16 %v230
    %v639 = vunpack.c.l.b16 %v231
    %v640 = vunpack.c.h.b16 %v231
    %v641 = vunpack.c.l.b16 %v232
    %v642 = vunpack.c.h.b16 %v232
    %v643 = vunpack.c.l.b16 %v233
    %v644 = vunpack.c.h.b16 %v233
    %v645 = vunpack.c.l.b16 %v234
    %v646 = vunpack.c.h.b16 %v234
    %v647 = vunpack.c.l.b16 %v235
    %v648 = vunpack.c.h.b16 %v235
    %v649 = vunpack.c.l.b16 %v236
    %v650 = vunpack.c.h.b16 %v236
    %v651 = vunpack.c.l.b16 %v237
    %v652 = vunpack.c.h.b16 %v237
    %v653 = vunpack.c.l.b16 %v238
    %v654 = vunpack.c.h.b16 %v238
    %v655 = vunpack.c.l.b16 %v239
    %v656 = vunpack.c.h.b16 %v239
    %v657 = vunpack.c.l.b16 %v240
    %v658 = vunpack.c.h.b16 %v240
    %v659 = vunpack.c.l.b16 %v241
    %v660 = vunpack.c.h.b16 %v241
    %v661 = vunpack.c.l.b16 %v242
    %v662 = vunpack.c.h.b16 %v242
    %v663 = vpack.c.b16 %v411, %v407
    %v664 = vpack.c.b16 %v412, %v408
    %v665 = vpack.c.b16 %v413, %v409
    %v666 = vpack.c.b16 %v414, %v410
    %v667 = vpack.c.b16 %v419, %v415
    %v668 = vpack.c.b16 %v420, %v416
    %v669 = vpack.c.b16 %v421, %v417
    %v670 = vpack.c.b16 %v422, %v418
    %v671 = vpack.c.b16 %v427, %v423
    %v672 = vpack.c.b16 %v428, %v424
    %v673 = vpack.c.b16 %v429, %v425
    %v674 = vpack.c.b16 %v430, %v426
    %v675 = vpack.c.b16 %v435, %v431
    %v676 = vpack.c.b16 %v436, %v432
    %v677 = vpack.c.b16 %v437, %v433
    %v678 = vpack.c.b16 %v438, %v434
    %v679 = vpack.c.b16 %v443, %v439
    %v680 = vpack.c.b16 %v444, %v440
    %v681 = vpack.c.b16 %v445, %v441
    %v682 = vpack.c.b16 %v446, %v442
    %v683 = vpack.c.b16 %v451, %v447
    %v684 = vpack.c.b16 %v452, %v448
    %v685 = vpack.c.b16 %v453, %v449
    %v686 = vpack.c.b16 %v454, %v450
    %v687 = vpack.c.b16 %v459, %v455
    %v688 = vpack.c.b16 %v460, %v456
    %v689 = vpack.c.b16 %v461, %v457
    %v690 = vpack.c.b16 %v462, %v458
    %v691 = vpack.c.b16 %v467, %v463
    %v692 = vpack.c.b16 %v468, %v464
    %v693 = vpack.c.b16 %v469, %v465
    %v694 = vpack.c.b16 %v470, %v466
    %v695 = vpack.c.b16 %v475, %v471
    %v696 = vpack.c.b16 %v476, %v472
    %v697 = vpack.c.b16 %v477, %v473
    %v698 = vpack.c.b16 %v478, %v474
    %v699 = vpack.c.b16 %v483, %v479
    %v700 = vpack.c.b16 %v484, %v480
    %v701 = vpack.c.b16 %v485, %v481
    %v702 = vpack.c.b16 %v486, %v482
    %v703 = vpack.c.b16 %v491, %v487
    %v704 = vpack.c.b16 %v492, %v488
    %v705 = vpack.c.b16 %v493, %v489
    %v706 = vpack.c.b16 %v494, %v490
    %v707 = vpack.c.b16 %v499, %v495
    %v708 = vpack.c.b16 %v500, %v496
    %v709 = vpack.c.b16 %v501, %v497
    %v710 = vpack.c.b16 %v502, %v498
    %v711 = vpack.c.b16 %v507, %v503
    %v712 = vpack.c.b16 %v508, %v504
    %v713 = vpack.c.b16 %v509, %v505
    %v714 = vpack.c.b16 %v510, %v506
    %v715 = vpack.c.b16 %v515, %v511
    %v716 = vpack.c.b16 %v516, %v512
    %v717 = vpack.c.b16 %v517, %v513
    %v718 = vpack.c.b16 %v518, %v514
    %v719 = vpack.c.b16 %v523, %v519
    %v720 = vpack.c.b16 %v524, %v520
    %v721 = vpack.c.b16 %v525, %v521
    %v722 = vpack.c.b16 %v526, %v522
    %v723 = vpack.c.b16 %v531, %v527
    %v724 = vpack.c.b16 %v532, %v528
    %v725 = vpack.c.b16 %v533, %v529
    %v726 = vpack.c.b16 %v534, %v530
    %v727 = vpack.c.b16 %v539, %v535
    %v728 = vpack.c.b16 %v540, %v536
    %v729 = vpack.c.b16 %v541, %v537
    %v730 = vpack.c.b16 %v542, %v538
    %v731 = vpack.c.b16 %v547, %v543
    %v732 = vpack.c.b16 %v548, %v544
    %v733 = vpack.c.b16 %v549, %v545
    %v734 = vpack.c.b16 %v550, %v546
    %v735 = vpack.c.b16 %v555, %v551
    %v736 = vpack.c.b16 %v556, %v552
    %v737 = vpack.c.b16 %v557, %v553
    %v738 = vpack.c.b16 %v558, %v554
    %v739 = vpack.c.b16 %v563, %v559
    %v740 = vpack.c.b16 %v564, %v560
    %v741 = vpack.c.b16 %v565, %v561
    %v742 = vpack.c.b16 %v566, %v562
    %v743 = vpack.c.b16 %v571, %v567
    %v744 = vpack.c.b16 %v572, %v568
    %v745 = vpack.c.b16 %v573, %v569
    %v746 = vpack.c.b16 %v574, %v570
    %v747 = vpack.c.b16 %v579, %v575
    %v748 = vpack.c.b16 %v580, %v576
    %v749 = vpack.c.b16 %v581, %v577
    %v750 = vpack.c.b16 %v582, %v578
    %v751 = vpack.c.b16 %v587, %v583
    %v752 = vpack.c.b16 %v588, %v584
    %v753 = vpack.c.b16 %v589, %v585
    %v754 = vpack.c.b16 %v590, %v586
    %v755 = vpack.c.b16 %v595, %v591
    %v756 = vpack.c.b16 %v596, %v592
    %v757 = vpack.c.b16 %v597, %v593
    %v758 = vpack.c.b16 %v598, %v594
    %v759 = vpack.c.b16 %v603, %v599
    %v760 = vpack.c.b16 %v604, %v600
    %v761 = vpack.c.b16 %v605, %v601
    %v762 = vpack.c.b16 %v606, %v602
    %v763 = vpack.c.b16 %v611, %v607
    %v764 = vpack.c.b16 %v612, %v608
    %v765 = vpack.c.b16 %v613, %v609
    %v766 = vpack.c.b16 %v614, %v610
    %v767 = vpack.c.b16 %v619, %v615
    %v768 = vpack.c.b16 %v620, %v616
    %v769 = vpack.c.b16 %v621, %v617
    %v770 = vpack.c.b16 %v622, %v618
    %v771 = vpack.c.b16 %v627, %v623
    %v772 = vpack.c.b16 %v628, %v624
    %v773 = vpack.c.b16 %v629, %v625
    %v774 = vpack.c.b16 %v630, %v626
    %v775 = vpack.c.b16 %v635, %v631
    %v776 = vpack.c.b16 %v636, %v632
    %v777 = vpack.c.b16 %v637, %v633
    %v778 = vpack.c.b16 %v638, %v634
    %v779 = vpack.c.b16 %v643, %v639
    %v780 = vpack.c.b16 %v644, %v640
    %v781 = vpack.c.b16 %v645, %v641
    %v782 = vpack.c.b16 %v646, %v642
    %v783 = vpack.c.b16 %v651, %v647
    %v784 = vpack.c.b16 %v652, %v648
    %v785 = vpack.c.b16 %v653, %v649
    %v786 = vpack.c.b16 %v654, %v650
    %v787 = vpack.c.b16 %v659, %v655
    %v788 = vpack.c.b16 %v660, %v656
    %v789 = vpack.c.b16 %v661, %v657
    %v790 = vpack.c.b16 %v662, %v658
    %919 = vmatprep.subr.bf16.mxu0 %v692
    %920 = vmatpush1.bf16.msra.mxu0 %v691
    %921 = vmatprep.subr.bf16.mxu0 %v688
    %922 = vmatpush1.bf16.msra.mxu0 %v687
    %923 = vmatprep.subr.bf16.mxu0 %v684
    %924 = vmatpush1.bf16.msra.mxu0 %v683
    %925 = vmatprep.subr.bf16.mxu0 %v680
    %926 = vmatpush1.bf16.msra.mxu0 %v679
    %927 = vmatprep.subr.bf16.mxu0 %v676
    %928 = vmatpush1.bf16.msra.mxu0 %v675
    %929 = vmatprep.subr.bf16.mxu0 %v672
    %930 = vmatpush1.bf16.msra.mxu0 %v671
    %931 = vmatprep.subr.bf16.mxu0 %v668
    %932 = vmatpush1.bf16.msra.mxu0 %v667
    %933 = vmatprep.subr.bf16.mxu0 %v664
    %934 = vmatpush1.bf16.msra.mxu0 %v663
    %935 = vmatprep.subr.bf16.mxu0 %v724
    %936 = vmatpush2.bf16.msra.mxu0 %v723
    %937 = vmatprep.subr.bf16.mxu0 %v720
    %938 = vmatpush2.bf16.msra.mxu0 %v719
    %939 = vmatprep.subr.bf16.mxu0 %v716
    %940 = vmatpush2.bf16.msra.mxu0 %v715
    %941 = vmatprep.subr.bf16.mxu0 %v712
    %942 = vmatpush2.bf16.msra.mxu0 %v711
    %943 = vmatprep.subr.bf16.mxu0 %v708
    %944 = vmatpush2.bf16.msra.mxu0 %v707
    %945 = vmatprep.subr.bf16.mxu0 %v704
    %946 = vmatpush2.bf16.msra.mxu0 %v703
    %947 = vmatprep.subr.bf16.mxu0 %v700
    %948 = vmatpush2.bf16.msra.mxu0 %v699
    %949 = vmatprep.subr.bf16.mxu0 %v696
    %950 = vmatpush2.bf16.msra.mxu0 %v695
    %951 = vmatprep.mubr.bf16.mxu0 %v272
    %952 = vmatmul.mubr.bf16.gmra.mxu0 %v271
    %v953 = vpop.f32.mrf.mxu0
    %v954 = vadd.f32 %v248, %v953
    %v955 = vpop.f32.mrf.mxu0
    %v956 = vadd.f32 %v252, %v955
    %v957 = vpop.f32.mrf.mxu0
    %v958 = vpop.f32.mrf.mxu0
    %959 = vdwg.mxu0
    %960 = vmatprep.subr.bf16.mxu0 %v756
    %961 = vmatpush1.bf16.msra.mxu0 %v755
    %962 = vmatprep.subr.bf16.mxu0 %v752
    %963 = vmatpush1.bf16.msra.mxu0 %v751
    %964 = vmatprep.subr.bf16.mxu0 %v748
    %965 = vmatpush1.bf16.msra.mxu0 %v747
    %966 = vmatprep.subr.bf16.mxu0 %v744
    %967 = vmatpush1.bf16.msra.mxu0 %v743
    %968 = vmatprep.subr.bf16.mxu0 %v740
    %969 = vmatpush1.bf16.msra.mxu0 %v739
    %970 = vmatprep.subr.bf16.mxu0 %v736
    %971 = vmatpush1.bf16.msra.mxu0 %v735
    %972 = vmatprep.subr.bf16.mxu0 %v732
    %973 = vmatpush1.bf16.msra.mxu0 %v731
    %974 = vmatprep.subr.bf16.mxu0 %v728
    %975 = vmatpush1.bf16.msra.mxu0 %v727
    %976 = vmatprep.subr.bf16.mxu0 %v788
    %977 = vmatpush2.bf16.msra.mxu0 %v787
    %978 = vmatprep.subr.bf16.mxu0 %v784
    %979 = vmatpush2.bf16.msra.mxu0 %v783
    %980 = vmatprep.subr.bf16.mxu0 %v780
    %981 = vmatpush2.bf16.msra.mxu0 %v779
    %982 = vmatprep.subr.bf16.mxu0 %v776
    %983 = vmatpush2.bf16.msra.mxu0 %v775
    %984 = vmatprep.subr.bf16.mxu0 %v772
    %985 = vmatpush2.bf16.msra.mxu0 %v771
    %986 = vmatprep.subr.bf16.mxu0 %v768
    %987 = vmatpush2.bf16.msra.mxu0 %v767
    %988 = vmatprep.subr.bf16.mxu0 %v764
    %989 = vmatpush2.bf16.msra.mxu0 %v763
    %990 = vmatprep.subr.bf16.mxu0 %v760
    %991 = vmatpush2.bf16.msra.mxu0 %v759
    %992 = vmatprep.mubr.bf16.mxu0 %v274
    %993 = vmatmul.mubr.bf16.gmra.mxu0 %v273
    %v994 = vpop.f32.mrf.mxu0
    %v995 = vadd.f32 %v954, %v994
    %v996 = vpop.f32.mrf.mxu0
    %v997 = vadd.f32 %v956, %v996
    %v998 = vpop.f32.mrf.mxu0
    %v999 = vpop.f32.mrf.mxu0
    %1000 = vdwg.mxu0
    %1001 = vmatprep.subr.bf16.mxu0 %v694
    %1002 = vmatpush1.bf16.msra.mxu0 %v693
    %1003 = vmatprep.subr.bf16.mxu0 %v690
    %1004 = vmatpush1.bf16.msra.mxu0 %v689
    %1005 = vmatprep.subr.bf16.mxu0 %v686
    %1006 = vmatpush1.bf16.msra.mxu0 %v685
    %1007 = vmatprep.subr.bf16.mxu0 %v682
    %1008 = vmatpush1.bf16.msra.mxu0 %v681
    %1009 = vmatprep.subr.bf16.mxu0 %v678
    %1010 = vmatpush1.bf16.msra.mxu0 %v677
    %1011 = vmatprep.subr.bf16.mxu0 %v674
    %1012 = vmatpush1.bf16.msra.mxu0 %v673
    %1013 = vmatprep.subr.bf16.mxu0 %v670
    %1014 = vmatpush1.bf16.msra.mxu0 %v669
    %1015 = vmatprep.subr.bf16.mxu0 %v666
    %1016 = vmatpush1.bf16.msra.mxu0 %v665
    %1017 = vmatprep.subr.bf16.mxu0 %v726
    %1018 = vmatpush2.bf16.msra.mxu0 %v725
    %1019 = vmatprep.subr.bf16.mxu0 %v722
    %1020 = vmatpush2.bf16.msra.mxu0 %v721
    %1021 = vmatprep.subr.bf16.mxu0 %v718
    %1022 = vmatpush2.bf16.msra.mxu0 %v717
    %1023 = vmatprep.subr.bf16.mxu0 %v714
    %1024 = vmatpush2.bf16.msra.mxu0 %v713
    %1025 = vmatprep.subr.bf16.mxu0 %v710
    %1026 = vmatpush2.bf16.msra.mxu0 %v709
    %1027 = vmatprep.subr.bf16.mxu0 %v706
    %1028 = vmatpush2.bf16.msra.mxu0 %v705
    %1029 = vmatprep.subr.bf16.mxu0 %v702
    %1030 = vmatpush2.bf16.msra.mxu0 %v701
    %1031 = vmatprep.subr.bf16.mxu0 %v698
    %1032 = vmatpush2.bf16.msra.mxu0 %v697
    %1033 = vmatprep.mubr.bf16.mxu0 %v272
    %1034 = vmatmul.mubr.bf16.gmra.mxu0 %v271
    %v1035 = vpop.f32.mrf.mxu0
    %v1036 = vadd.f32 %v256, %v1035
    %v1037 = vpop.f32.mrf.mxu0
    %v1038 = vadd.f32 %v260, %v1037
    %v1039 = vpop.f32.mrf.mxu0
    %v1040 = vpop.f32.mrf.mxu0
    %1041 = vdwg.mxu0
    %1042 = vmatprep.subr.bf16.mxu0 %v758
    %1043 = vmatpush1.bf16.msra.mxu0 %v757
    %1044 = vmatprep.subr.bf16.mxu0 %v754
    %1045 = vmatpush1.bf16.msra.mxu0 %v753
    %1046 = vmatprep.subr.bf16.mxu0 %v750
    %1047 = vmatpush1.bf16.msra.mxu0 %v749
    %1048 = vmatprep.subr.bf16.mxu0 %v746
    %1049 = vmatpush1.bf16.msra.mxu0 %v745
    %1050 = vmatprep.subr.bf16.mxu0 %v742
    %1051 = vmatpush1.bf16.msra.mxu0 %v741
    %1052 = vmatprep.subr.bf16.mxu0 %v738
    %1053 = vmatpush1.bf16.msra.mxu0 %v737
    %1054 = vmatprep.subr.bf16.mxu0 %v734
    %1055 = vmatpush1.bf16.msra.mxu0 %v733
    %1056 = vmatprep.subr.bf16.mxu0 %v730
    %1057 = vmatpush1.bf16.msra.mxu0 %v729
    %1058 = vmatprep.subr.bf16.mxu0 %v790
    %1059 = vmatpush2.bf16.msra.mxu0 %v789
    %1060 = vmatprep.subr.bf16.mxu0 %v786
    %1061 = vmatpush2.bf16.msra.mxu0 %v785
    %1062 = vmatprep.subr.bf16.mxu0 %v782
    %1063 = vmatpush2.bf16.msra.mxu0 %v781
    %1064 = vmatprep.subr.bf16.mxu0 %v778
    %1065 = vmatpush2.bf16.msra.mxu0 %v777
    %1066 = vmatprep.subr.bf16.mxu0 %v774
    %1067 = vmatpush2.bf16.msra.mxu0 %v773
    %1068 = vmatprep.subr.bf16.mxu0 %v770
    %1069 = vmatpush2.bf16.msra.mxu0 %v769
    %1070 = vmatprep.subr.bf16.mxu0 %v766
    %1071 = vmatpush2.bf16.msra.mxu0 %v765
    %1072 = vmatprep.subr.bf16.mxu0 %v762
    %1073 = vmatpush2.bf16.msra.mxu0 %v761
    %1074 = vmatprep.mubr.bf16.mxu0 %v274
    %1075 = vmatmul.mubr.bf16.gmra.mxu0 %v273
    %v1076 = vpop.f32.mrf.mxu0
    %v1077 = vadd.f32 %v1036, %v1076
    %v1078 = vpop.f32.mrf.mxu0
    %v1079 = vadd.f32 %v1038, %v1078
    %v1080 = vpop.f32.mrf.mxu0
    %v1081 = vpop.f32.mrf.mxu0
    %1082 = vdwg.mxu0
    %v1083 = vmax.f32 %v995, 0.0
    %v1084 = vmax.f32 %v997, 0.0
    %v1085 = vmax.f32 %v1077, 0.0
    %v1086 = vmax.f32 %v1079, 0.0
    %v1087 = vpack.c.bf16 %v1083, %v1083
    %v1088 = vpack.c.bf16 %v1084, %v1084
    %v1089 = vpack.c.bf16 %v1085, %v1085
    %v1090 = vpack.c.bf16 %v1086, %v1086
    %v1091 = vld [vmem:[#allocation4] sm:$0xff]
    %v1092 = vld [vmem:[#allocation4 + $0x8] sm:$0xff]
    %v1093 = vld [vmem:[#allocation4 + $0x10] sm:$0xff]
    %v1094 = vld [vmem:[#allocation4 + $0x18] sm:$0xff]
    %v1095 = vld [vmem:[#allocation4 + $0x20] sm:$0xff]
    %v1096 = vld [vmem:[#allocation4 + $0x28] sm:$0xff]
    %v1097 = vld [vmem:[#allocation4 + $0x30] sm:$0xff]
    %v1098 = vld [vmem:[#allocation4 + $0x38] sm:$0xff]
    %v1099 = vld [vmem:[#allocation4 + $0x40] sm:$0xff]
    %v1100 = vld [vmem:[#allocation4 + $0x48] sm:$0xff]
    %v1101 = vld [vmem:[#allocation4 + $0x50] sm:$0xff]
    %v1102 = vld [vmem:[#allocation4 + $0x58] sm:$0xff]
    %v1103 = vld [vmem:[#allocation4 + $0x60] sm:$0xff]
    %v1104 = vld [vmem:[#allocation4 + $0x68] sm:$0xff]
    %v1105 = vld [vmem:[#allocation4 + $0x70] sm:$0xff]
    %v1106 = vld [vmem:[#allocation4 + $0x78] sm:$0xff]
    %v1107 = vld [vmem:[#allocation4 + $0x80] sm:$0xff]
    %v1108 = vld [vmem:[#allocation4 + $0x88] sm:$0xff]
    %v1109 = vld [vmem:[#allocation4 + $0x90] sm:$0xff]
    %v1110 = vld [vmem:[#allocation4 + $0x98] sm:$0xff]
    %v1111 = vld [vmem:[#allocation4 + $0xa0] sm:$0xff]
    %v1112 = vld [vmem:[#allocation4 + $0xa8] sm:$0xff]
    %v1113 = vld [vmem:[#allocation4 + $0xb0] sm:$0xff]
    %v1114 = vld [vmem:[#allocation4 + $0xb8] sm:$0xff]
    %v1115 = vld [vmem:[#allocation4 + $0xc0] sm:$0xff]
    %v1116 = vld [vmem:[#allocation4 + $0xc8] sm:$0xff]
    %v1117 = vld [vmem:[#allocation4 + $0xd0] sm:$0xff]
    %v1118 = vld [vmem:[#allocation4 + $0xd8] sm:$0xff]
    %v1119 = vld [vmem:[#allocation4 + $0xe0] sm:$0xff]
    %v1120 = vld [vmem:[#allocation4 + $0xe8] sm:$0xff]
    %v1121 = vld [vmem:[#allocation4 + $0xf0] sm:$0xff]
    %v1122 = vld [vmem:[#allocation4 + $0xf8] sm:$0xff]
    %v1123 = vld [vmem:[#allocation4 + $0x100] sm:$0xff]
    %v1124 = vld [vmem:[#allocation4 + $0x108] sm:$0xff]
    %v1125 = vld [vmem:[#allocation4 + $0x110] sm:$0xff]
    %v1126 = vld [vmem:[#allocation4 + $0x118] sm:$0xff]
    %v1127 = vld [vmem:[#allocation4 + $0x120] sm:$0xff]
    %v1128 = vld [vmem:[#allocation4 + $0x128] sm:$0xff]
    %v1129 = vld [vmem:[#allocation4 + $0x130] sm:$0xff]
    %v1130 = vld [vmem:[#allocation4 + $0x138] sm:$0xff]
    %v1131 = vld [vmem:[#allocation4 + $0x140] sm:$0xff]
    %v1132 = vld [vmem:[#allocation4 + $0x148] sm:$0xff]
    %v1133 = vld [vmem:[#allocation4 + $0x150] sm:$0xff]
    %v1134 = vld [vmem:[#allocation4 + $0x158] sm:$0xff]
    %v1135 = vld [vmem:[#allocation4 + $0x160] sm:$0xff]
    %v1136 = vld [vmem:[#allocation4 + $0x168] sm:$0xff]
    %v1137 = vld [vmem:[#allocation4 + $0x170] sm:$0xff]
    %v1138 = vld [vmem:[#allocation4 + $0x178] sm:$0xff]
    %v1139 = vld [vmem:[#allocation4 + $0x180] sm:$0xff]
    %v1140 = vld [vmem:[#allocation4 + $0x188] sm:$0xff]
    %v1141 = vld [vmem:[#allocation4 + $0x190] sm:$0xff]
    %v1142 = vld [vmem:[#allocation4 + $0x198] sm:$0xff]
    %v1143 = vld [vmem:[#allocation4 + $0x1a0] sm:$0xff]
    %v1144 = vld [vmem:[#allocation4 + $0x1a8] sm:$0xff]
    %v1145 = vld [vmem:[#allocation4 + $0x1b0] sm:$0xff]
    %v1146 = vld [vmem:[#allocation4 + $0x1b8] sm:$0xff]
    %v1147 = vld [vmem:[#allocation4 + $0x1c0] sm:$0xff]
    %v1148 = vld [vmem:[#allocation4 + $0x1c8] sm:$0xff]
    %v1149 = vld [vmem:[#allocation4 + $0x1d0] sm:$0xff]
    %v1150 = vld [vmem:[#allocation4 + $0x1d8] sm:$0xff]
    %v1151 = vld [vmem:[#allocation4 + $0x1e0] sm:$0xff]
    %v1152 = vld [vmem:[#allocation4 + $0x1e8] sm:$0xff]
    %v1153 = vld [vmem:[#allocation4 + $0x1f0] sm:$0xff]
    %v1154 = vld [vmem:[#allocation4 + $0x1f8] sm:$0xff]
    %v1155 = vld [vmem:[%s4] sm:$0x3]
    %v1157 = vlaneseq
    %v1158 = vshrl.u32 %v1157, 7
    %v1159 = vsub.s32 0, %v1158
    %v1160 = vrot.slane %v1155, %v1159
    %v1161 = vlaneseq
    %v1162 = vshrl.u32 %v1161, 7
    %v1163 = vsub.s32 1, %v1162
    %v1164 = vrot.slane %v1155, %v1163
    %v1231 = vunpack.c.l.b16 %v1091
    %v1232 = vunpack.c.h.b16 %v1091
    %v1233 = vunpack.c.l.b16 %v1092
    %v1234 = vunpack.c.h.b16 %v1092
    %v1235 = vunpack.c.l.b16 %v1093
    %v1236 = vunpack.c.h.b16 %v1093
    %v1237 = vunpack.c.l.b16 %v1094
    %v1238 = vunpack.c.h.b16 %v1094
    %v1239 = vunpack.c.l.b16 %v1095
    %v1240 = vunpack.c.h.b16 %v1095
    %v1241 = vunpack.c.l.b16 %v1096
    %v1242 = vunpack.c.h.b16 %v1096
    %v1243 = vunpack.c.l.b16 %v1097
    %v1244 = vunpack.c.h.b16 %v1097
    %v1245 = vunpack.c.l.b16 %v1098
    %v1246 = vunpack.c.h.b16 %v1098
    %v1247 = vunpack.c.l.b16 %v1099
    %v1248 = vunpack.c.h.b16 %v1099
    %v1249 = vunpack.c.l.b16 %v1100
    %v1250 = vunpack.c.h.b16 %v1100
    %v1251 = vunpack.c.l.b16 %v1101
    %v1252 = vunpack.c.h.b16 %v1101
    %v1253 = vunpack.c.l.b16 %v1102
    %v1254 = vunpack.c.h.b16 %v1102
    %v1255 = vunpack.c.l.b16 %v1103
    %v1256 = vunpack.c.h.b16 %v1103
    %v1257 = vunpack.c.l.b16 %v1104
    %v1258 = vunpack.c.h.b16 %v1104
    %v1259 = vunpack.c.l.b16 %v1105
    %v1260 = vunpack.c.h.b16 %v1105
    %v1261 = vunpack.c.l.b16 %v1106
    %v1262 = vunpack.c.h.b16 %v1106
    %v1263 = vunpack.c.l.b16 %v1107
    %v1264 = vunpack.c.h.b16 %v1107
    %v1265 = vunpack.c.l.b16 %v1108
    %v1266 = vunpack.c.h.b16 %v1108
    %v1267 = vunpack.c.l.b16 %v1109
    %v1268 = vunpack.c.h.b16 %v1109
    %v1269 = vunpack.c.l.b16 %v1110
    %v1270 = vunpack.c.h.b16 %v1110
    %v1271 = vunpack.c.l.b16 %v1111
    %v1272 = vunpack.c.h.b16 %v1111
    %v1273 = vunpack.c.l.b16 %v1112
    %v1274 = vunpack.c.h.b16 %v1112
    %v1275 = vunpack.c.l.b16 %v1113
    %v1276 = vunpack.c.h.b16 %v1113
    %v1277 = vunpack.c.l.b16 %v1114
    %v1278 = vunpack.c.h.b16 %v1114
    %v1279 = vunpack.c.l.b16 %v1115
    %v1280 = vunpack.c.h.b16 %v1115
    %v1281 = vunpack.c.l.b16 %v1116
    %v1282 = vunpack.c.h.b16 %v1116
    %v1283 = vunpack.c.l.b16 %v1117
    %v1284 = vunpack.c.h.b16 %v1117
    %v1285 = vunpack.c.l.b16 %v1118
    %v1286 = vunpack.c.h.b16 %v1118
    %v1287 = vunpack.c.l.b16 %v1119
    %v1288 = vunpack.c.h.b16 %v1119
    %v1289 = vunpack.c.l.b16 %v1120
    %v1290 = vunpack.c.h.b16 %v1120
    %v1291 = vunpack.c.l.b16 %v1121
    %v1292 = vunpack.c.h.b16 %v1121
    %v1293 = vunpack.c.l.b16 %v1122
    %v1294 = vunpack.c.h.b16 %v1122
    %v1295 = vunpack.c.l.b16 %v1123
    %v1296 = vunpack.c.h.b16 %v1123
    %v1297 = vunpack.c.l.b16 %v1124
    %v1298 = vunpack.c.h.b16 %v1124
    %v1299 = vunpack.c.l.b16 %v1125
    %v1300 = vunpack.c.h.b16 %v1125
    %v1301 = vunpack.c.l.b16 %v1126
    %v1302 = vunpack.c.h.b16 %v1126
    %v1303 = vunpack.c.l.b16 %v1127
    %v1304 = vunpack.c.h.b16 %v1127
    %v1305 = vunpack.c.l.b16 %v1128
    %v1306 = vunpack.c.h.b16 %v1128
    %v1307 = vunpack.c.l.b16 %v1129
    %v1308 = vunpack.c.h.b16 %v1129
    %v1309 = vunpack.c.l.b16 %v1130
    %v1310 = vunpack.c.h.b16 %v1130
    %v1311 = vunpack.c.l.b16 %v1131
    %v1312 = vunpack.c.h.b16 %v1131
    %v1313 = vunpack.c.l.b16 %v1132
    %v1314 = vunpack.c.h.b16 %v1132
    %v1315 = vunpack.c.l.b16 %v1133
    %v1316 = vunpack.c.h.b16 %v1133
    %v1317 = vunpack.c.l.b16 %v1134
    %v1318 = vunpack.c.h.b16 %v1134
    %v1319 = vunpack.c.l.b16 %v1135
    %v1320 = vunpack.c.h.b16 %v1135
    %v1321 = vunpack.c.l.b16 %v1136
    %v1322 = vunpack.c.h.b16 %v1136
    %v1323 = vunpack.c.l.b16 %v1137
    %v1324 = vunpack.c.h.b16 %v1137
    %v1325 = vunpack.c.l.b16 %v1138
    %v1326 = vunpack.c.h.b16 %v1138
    %v1327 = vunpack.c.l.b16 %v1139
    %v1328 = vunpack.c.h.b16 %v1139
    %v1329 = vunpack.c.l.b16 %v1140
    %v1330 = vunpack.c.h.b16 %v1140
    %v1331 = vunpack.c.l.b16 %v1141
    %v1332 = vunpack.c.h.b16 %v1141
    %v1333 = vunpack.c.l.b16 %v1142
    %v1334 = vunpack.c.h.b16 %v1142
    %v1335 = vunpack.c.l.b16 %v1143
    %v1336 = vunpack.c.h.b16 %v1143
    %v1337 = vunpack.c.l.b16 %v1144
    %v1338 = vunpack.c.h.b16 %v1144
    %v1339 = vunpack.c.l.b16 %v1145
    %v1340 = vunpack.c.h.b16 %v1145
    %v1341 = vunpack.c.l.b16 %v1146
    %v1342 = vunpack.c.h.b16 %v1146
    %v1343 = vunpack.c.l.b16 %v1147
    %v1344 = vunpack.c.h.b16 %v1147
    %v1345 = vunpack.c.l.b16 %v1148
    %v1346 = vunpack.c.h.b16 %v1148
    %v1347 = vunpack.c.l.b16 %v1149
    %v1348 = vunpack.c.h.b16 %v1149
    %v1349 = vunpack.c.l.b16 %v1150
    %v1350 = vunpack.c.h.b16 %v1150
    %v1351 = vunpack.c.l.b16 %v1151
    %v1352 = vunpack.c.h.b16 %v1151
    %v1353 = vunpack.c.l.b16 %v1152
    %v1354 = vunpack.c.h.b16 %v1152
    %v1355 = vunpack.c.l.b16 %v1153
    %v1356 = vunpack.c.h.b16 %v1153
    %v1357 = vunpack.c.l.b16 %v1154
    %v1358 = vunpack.c.h.b16 %v1154
    %v1359 = vpack.c.b16 %v1233, %v1231
    %v1360 = vpack.c.b16 %v1234, %v1232
    %v1361 = vpack.c.b16 %v1237, %v1235
    %v1362 = vpack.c.b16 %v1238, %v1236
    %v1363 = vpack.c.b16 %v1241, %v1239
    %v1364 = vpack.c.b16 %v1242, %v1240
    %v1365 = vpack.c.b16 %v1245, %v1243
    %v1366 = vpack.c.b16 %v1246, %v1244
    %v1367 = vpack.c.b16 %v1249, %v1247
    %v1368 = vpack.c.b16 %v1250, %v1248
    %v1369 = vpack.c.b16 %v1253, %v1251
    %v1370 = vpack.c.b16 %v1254, %v1252
    %v1371 = vpack.c.b16 %v1257, %v1255
    %v1372 = vpack.c.b16 %v1258, %v1256
    %v1373 = vpack.c.b16 %v1261, %v1259
    %v1374 = vpack.c.b16 %v1262, %v1260
    %v1375 = vpack.c.b16 %v1265, %v1263
    %v1376 = vpack.c.b16 %v1266, %v1264
    %v1377 = vpack.c.b16 %v1269, %v1267
    %v1378 = vpack.c.b16 %v1270, %v1268
    %v1379 = vpack.c.b16 %v1273, %v1271
    %v1380 = vpack.c.b16 %v1274, %v1272
    %v1381 = vpack.c.b16 %v1277, %v1275
    %v1382 = vpack.c.b16 %v1278, %v1276
    %v1383 = vpack.c.b16 %v1281, %v1279
    %v1384 = vpack.c.b16 %v1282, %v1280
    %v1385 = vpack.c.b16 %v1285, %v1283
    %v1386 = vpack.c.b16 %v1286, %v1284
    %v1387 = vpack.c.b16 %v1289, %v1287
    %v1388 = vpack.c.b16 %v1290, %v1288
    %v1389 = vpack.c.b16 %v1293, %v1291
    %v1390 = vpack.c.b16 %v1294, %v1292
    %v1391 = vpack.c.b16 %v1297, %v1295
    %v1392 = vpack.c.b16 %v1298, %v1296
    %v1393 = vpack.c.b16 %v1301, %v1299
    %v1394 = vpack.c.b16 %v1302, %v1300
    %v1395 = vpack.c.b16 %v1305, %v1303
    %v1396 = vpack.c.b16 %v1306, %v1304
    %v1397 = vpack.c.b16 %v1309, %v1307
    %v1398 = vpack.c.b16 %v1310, %v1308
    %v1399 = vpack.c.b16 %v1313, %v1311
    %v1400 = vpack.c.b16 %v1314, %v1312
    %v1401 = vpack.c.b16 %v1317, %v1315
    %v1402 = vpack.c.b16 %v1318, %v1316
    %v1403 = vpack.c.b16 %v1321, %v1319
    %v1404 = vpack.c.b16 %v1322, %v1320
    %v1405 = vpack.c.b16 %v1325, %v1323
    %v1406 = vpack.c.b16 %v1326, %v1324
    %v1407 = vpack.c.b16 %v1329, %v1327
    %v1408 = vpack.c.b16 %v1330, %v1328
    %v1409 = vpack.c.b16 %v1333, %v1331
    %v1410 = vpack.c.b16 %v1334, %v1332
    %v1411 = vpack.c.b16 %v1337, %v1335
    %v1412 = vpack.c.b16 %v1338, %v1336
    %v1413 = vpack.c.b16 %v1341, %v1339
    %v1414 = vpack.c.b16 %v1342, %v1340
    %v1415 = vpack.c.b16 %v1345, %v1343
    %v1416 = vpack.c.b16 %v1346, %v1344
    %v1417 = vpack.c.b16 %v1349, %v1347
    %v1418 = vpack.c.b16 %v1350, %v1348
    %v1419 = vpack.c.b16 %v1353, %v1351
    %v1420 = vpack.c.b16 %v1354, %v1352
    %v1421 = vpack.c.b16 %v1357, %v1355
    %v1422 = vpack.c.b16 %v1358, %v1356
    %1487 = vmatprep.subr.bf16.mxu0 %v1374
    %1488 = vmatpush1.bf16.msra.mxu0 %v1373
    %1489 = vmatprep.subr.bf16.mxu0 %v1372
    %1490 = vmatpush1.bf16.msra.mxu0 %v1371
    %1491 = vmatprep.subr.bf16.mxu0 %v1370
    %1492 = vmatpush1.bf16.msra.mxu0 %v1369
    %1493 = vmatprep.subr.bf16.mxu0 %v1368
    %1494 = vmatpush1.bf16.msra.mxu0 %v1367
    %1495 = vmatprep.subr.bf16.mxu0 %v1366
    %1496 = vmatpush1.bf16.msra.mxu0 %v1365
    %1497 = vmatprep.subr.bf16.mxu0 %v1364
    %1498 = vmatpush1.bf16.msra.mxu0 %v1363
    %1499 = vmatprep.subr.bf16.mxu0 %v1362
    %1500 = vmatpush1.bf16.msra.mxu0 %v1361
    %1501 = vmatprep.subr.bf16.mxu0 %v1360
    %1502 = vmatpush1.bf16.msra.mxu0 %v1359
    %1503 = vmatprep.subr.bf16.mxu0 %v1390
    %1504 = vmatpush2.bf16.msra.mxu0 %v1389
    %1505 = vmatprep.subr.bf16.mxu0 %v1388
    %1506 = vmatpush2.bf16.msra.mxu0 %v1387
    %1507 = vmatprep.subr.bf16.mxu0 %v1386
    %1508 = vmatpush2.bf16.msra.mxu0 %v1385
    %1509 = vmatprep.subr.bf16.mxu0 %v1384
    %1510 = vmatpush2.bf16.msra.mxu0 %v1383
    %1511 = vmatprep.subr.bf16.mxu0 %v1382
    %1512 = vmatpush2.bf16.msra.mxu0 %v1381
    %1513 = vmatprep.subr.bf16.mxu0 %v1380
    %1514 = vmatpush2.bf16.msra.mxu0 %v1379
    %1515 = vmatprep.subr.bf16.mxu0 %v1378
    %1516 = vmatpush2.bf16.msra.mxu0 %v1377
    %1517 = vmatprep.subr.bf16.mxu0 %v1376
    %1518 = vmatpush2.bf16.msra.mxu0 %v1375
    %1519 = vmatprep.mubr.bf16.mxu0 %v1088
    %1520 = vmatmul.mubr.bf16.gmra.mxu0 %v1087
    %v1521 = vpop.f32.mrf.mxu0
    %v1522 = vadd.f32 %v1160, %v1521
    %v1523 = vpop.f32.mrf.mxu0
    %v1524 = vadd.f32 %v1164, %v1523
    %v1525 = vpop.f32.mrf.mxu0
    %v1526 = vpop.f32.mrf.mxu0
    %1527 = vdwg.mxu0
    %1528 = vmatprep.subr.bf16.mxu0 %v1406
    %1529 = vmatpush1.bf16.msra.mxu0 %v1405
    %1530 = vmatprep.subr.bf16.mxu0 %v1404
    %1531 = vmatpush1.bf16.msra.mxu0 %v1403
    %1532 = vmatprep.subr.bf16.mxu0 %v1402
    %1533 = vmatpush1.bf16.msra.mxu0 %v1401
    %1534 = vmatprep.subr.bf16.mxu0 %v1400
    %1535 = vmatpush1.bf16.msra.mxu0 %v1399
    %1536 = vmatprep.subr.bf16.mxu0 %v1398
    %1537 = vmatpush1.bf16.msra.mxu0 %v1397
    %1538 = vmatprep.subr.bf16.mxu0 %v1396
    %1539 = vmatpush1.bf16.msra.mxu0 %v1395
    %1540 = vmatprep.subr.bf16.mxu0 %v1394
    %1541 = vmatpush1.bf16.msra.mxu0 %v1393
    %1542 = vmatprep.subr.bf16.mxu0 %v1392
    %1543 = vmatpush1.bf16.msra.mxu0 %v1391
    %1544 = vmatprep.subr.bf16.mxu0 %v1422
    %1545 = vmatpush2.bf16.msra.mxu0 %v1421
    %1546 = vmatprep.subr.bf16.mxu0 %v1420
    %1547 = vmatpush2.bf16.msra.mxu0 %v1419
    %1548 = vmatprep.subr.bf16.mxu0 %v1418
    %1549 = vmatpush2.bf16.msra.mxu0 %v1417
    %1550 = vmatprep.subr.bf16.mxu0 %v1416
    %1551 = vmatpush2.bf16.msra.mxu0 %v1415
    %1552 = vmatprep.subr.bf16.mxu0 %v1414
    %1553 = vmatpush2.bf16.msra.mxu0 %v1413
    %1554 = vmatprep.subr.bf16.mxu0 %v1412
    %1555 = vmatpush2.bf16.msra.mxu0 %v1411
    %1556 = vmatprep.subr.bf16.mxu0 %v1410
    %1557 = vmatpush2.bf16.msra.mxu0 %v1409
    %1558 = vmatprep.subr.bf16.mxu0 %v1408
    %1559 = vmatpush2.bf16.msra.mxu0 %v1407
    %1560 = vmatprep.mubr.bf16.mxu0 %v1090
    %1561 = vmatmul.mubr.bf16.gmra.mxu0 %v1089
    %v1562 = vpop.f32.mrf.mxu0
    %v1563 = vadd.f32 %v1522, %v1562
    %v1564 = vpop.f32.mrf.mxu0
    %v1565 = vadd.f32 %v1524, %v1564
    %v1566 = vpop.f32.mrf.mxu0
    %v1567 = vpop.f32.mrf.mxu0
    %1568 = vdwg.mxu0
    %v1569 = vmax.f32 %v1563, 0.0
    %v1570 = vmax.f32 %v1565, 0.0
    %v1571 = vpack.c.bf16 %v1569, %v1569
    %v1572 = vpack.c.bf16 %v1570, %v1570
    %v1573 = vld [vmem:[%s5] sm:$0xf]
    %v1574 = vld [vmem:[%s5 + $0x4] sm:$0xf]
    %v1575 = vld [vmem:[%s5 + $0x8] sm:$0xf]
    %v1576 = vld [vmem:[%s5 + $0xc] sm:$0xf]
    %v1577 = vld [vmem:[%s5 + $0x10] sm:$0xf]
    %v1578 = vld [vmem:[%s5 + $0x14] sm:$0xf]
    %v1579 = vld [vmem:[%s5 + $0x18] sm:$0xf]
    %v1580 = vld [vmem:[%s5 + $0x1c] sm:$0xf]
    %v1581 = vld [vmem:[%s5 + $0x20] sm:$0xf]
    %v1582 = vld [vmem:[%s5 + $0x24] sm:$0xf]
    %v1583 = vld [vmem:[%s5 + $0x28] sm:$0xf]
    %v1584 = vld [vmem:[%s5 + $0x2c] sm:$0xf]
    %v1585 = vld [vmem:[%s5 + $0x30] sm:$0xf]
    %v1586 = vld [vmem:[%s5 + $0x34] sm:$0xf]
    %v1587 = vld [vmem:[%s5 + $0x38] sm:$0xf]
    %v1588 = vld [vmem:[%s5 + $0x3c] sm:$0xf]
    %v1589 = vld [vmem:[%s5 + $0x40] sm:$0xf]
    %v1590 = vld [vmem:[%s5 + $0x44] sm:$0xf]
    %v1591 = vld [vmem:[%s5 + $0x48] sm:$0xf]
    %v1592 = vld [vmem:[%s5 + $0x4c] sm:$0xf]
    %v1593 = vld [vmem:[%s5 + $0x50] sm:$0xf]
    %v1594 = vld [vmem:[%s5 + $0x54] sm:$0xf]
    %v1595 = vld [vmem:[%s5 + $0x58] sm:$0xf]
    %v1596 = vld [vmem:[%s5 + $0x5c] sm:$0xf]
    %v1597 = vld [vmem:[%s5 + $0x60] sm:$0xf]
    %v1598 = vld [vmem:[%s5 + $0x64] sm:$0xf]
    %v1599 = vld [vmem:[%s5 + $0x68] sm:$0xf]
    %v1600 = vld [vmem:[%s5 + $0x6c] sm:$0xf]
    %v1601 = vld [vmem:[%s5 + $0x70] sm:$0xf]
    %v1602 = vld [vmem:[%s5 + $0x74] sm:$0xf]
    %v1603 = vld [vmem:[%s5 + $0x78] sm:$0xf]
    %v1604 = vld [vmem:[%s5 + $0x7c] sm:$0xf]
    %v1605 = vld [vmem:[%s6] sm:$0x1]
    %v1607 = vlaneseq
    %v1608 = vshrl.u32 %v1607, 7
    %v1609 = vsub.s32 0, %v1608
    %v1610 = vrot.slane %v1605, %v1609
    %v1644 = vunpack.c.l.b16 %v1573
    %v1645 = vunpack.c.l.b16 %v1574
    %v1646 = vunpack.c.l.b16 %v1575
    %v1647 = vunpack.c.l.b16 %v1576
    %v1648 = vunpack.c.l.b16 %v1577
    %v1649 = vunpack.c.l.b16 %v1578
    %v1650 = vunpack.c.l.b16 %v1579
    %v1651 = vunpack.c.l.b16 %v1580
    %v1652 = vunpack.c.l.b16 %v1581
    %v1653 = vunpack.c.l.b16 %v1582
    %v1654 = vunpack.c.l.b16 %v1583
    %v1655 = vunpack.c.l.b16 %v1584
    %v1656 = vunpack.c.l.b16 %v1585
    %v1657 = vunpack.c.l.b16 %v1586
    %v1658 = vunpack.c.l.b16 %v1587
    %v1659 = vunpack.c.l.b16 %v1588
    %v1660 = vunpack.c.l.b16 %v1589
    %v1661 = vunpack.c.l.b16 %v1590
    %v1662 = vunpack.c.l.b16 %v1591
    %v1663 = vunpack.c.l.b16 %v1592
    %v1664 = vunpack.c.l.b16 %v1593
    %v1665 = vunpack.c.l.b16 %v1594
    %v1666 = vunpack.c.l.b16 %v1595
    %v1667 = vunpack.c.l.b16 %v1596
    %v1668 = vunpack.c.l.b16 %v1597
    %v1669 = vunpack.c.l.b16 %v1598
    %v1670 = vunpack.c.l.b16 %v1599
    %v1671 = vunpack.c.l.b16 %v1600
    %v1672 = vunpack.c.l.b16 %v1601
    %v1673 = vunpack.c.l.b16 %v1602
    %v1674 = vunpack.c.l.b16 %v1603
    %v1675 = vunpack.c.l.b16 %v1604
    %v1676 = vpack.c.b16 %v1645, %v1644
    %v1677 = vpack.c.b16 %v1647, %v1646
    %v1678 = vpack.c.b16 %v1649, %v1648
    %v1679 = vpack.c.b16 %v1651, %v1650
    %v1680 = vpack.c.b16 %v1653, %v1652
    %v1681 = vpack.c.b16 %v1655, %v1654
    %v1682 = vpack.c.b16 %v1657, %v1656
    %v1683 = vpack.c.b16 %v1659, %v1658
    %v1684 = vpack.c.b16 %v1661, %v1660
    %v1685 = vpack.c.b16 %v1663, %v1662
    %v1686 = vpack.c.b16 %v1665, %v1664
    %v1687 = vpack.c.b16 %v1667, %v1666
    %v1688 = vpack.c.b16 %v1669, %v1668
    %v1689 = vpack.c.b16 %v1671, %v1670
    %v1690 = vpack.c.b16 %v1673, %v1672
    %v1691 = vpack.c.b16 %v1675, %v1674
    %1708 = vmatprep.subr.bf16.mxu0 0
    %1709 = vmatpush1.bf16.msra.mxu0 %v1683
    %1710 = vmatprep.subr.bf16.mxu0 0
    %1711 = vmatpush1.bf16.msra.mxu0 %v1682
    %1712 = vmatprep.subr.bf16.mxu0 0
    %1713 = vmatpush1.bf16.msra.mxu0 %v1681
    %1714 = vmatprep.subr.bf16.mxu0 0
    %1715 = vmatpush1.bf16.msra.mxu0 %v1680
    %1716 = vmatprep.subr.bf16.mxu0 0
    %1717 = vmatpush1.bf16.msra.mxu0 %v1679
    %1718 = vmatprep.subr.bf16.mxu0 0
    %1719 = vmatpush1.bf16.msra.mxu0 %v1678
    %1720 = vmatprep.subr.bf16.mxu0 0
    %1721 = vmatpush1.bf16.msra.mxu0 %v1677
    %1722 = vmatprep.subr.bf16.mxu0 0
    %1723 = vmatpush1.bf16.msra.mxu0 %v1676
    %1724 = vmatprep.subr.bf16.mxu0 0
    %1725 = vmatpush2.bf16.msra.mxu0 %v1691
    %1726 = vmatprep.subr.bf16.mxu0 0
    %1727 = vmatpush2.bf16.msra.mxu0 %v1690
    %1728 = vmatprep.subr.bf16.mxu0 0
    %1729 = vmatpush2.bf16.msra.mxu0 %v1689
    %1730 = vmatprep.subr.bf16.mxu0 0
    %1731 = vmatpush2.bf16.msra.mxu0 %v1688
    %1732 = vmatprep.subr.bf16.mxu0 0
    %1733 = vmatpush2.bf16.msra.mxu0 %v1687
    %1734 = vmatprep.subr.bf16.mxu0 0
    %1735 = vmatpush2.bf16.msra.mxu0 %v1686
    %1736 = vmatprep.subr.bf16.mxu0 0
    %1737 = vmatpush2.bf16.msra.mxu0 %v1685
    %1738 = vmatprep.subr.bf16.mxu0 0
    %1739 = vmatpush2.bf16.msra.mxu0 %v1684
    %1740 = vmatprep.mubr.bf16.mxu0 %v1572
    %1741 = vmatmul.mubr.bf16.gmra.mxu0 %v1571
    %v1742 = vpop.f32.mrf.mxu0
    %v1743 = vadd.f32 %v1610, %v1742
    %v1744 = vpop.f32.mrf.mxu0
    %v1745 = vpop.f32.mrf.mxu0
    %v1746 = vpop.f32.mrf.mxu0
    %1747 = vdwg.mxu0
    %v1748 = vmax.f32 %v1743, 0.0
    %v1749 = vpack.c.bf16 %v1748, %v1748
    %v1750 = vld [vmem:[#allocation6] sm:$0xff]
    %v1751 = vld [vmem:[#allocation6 + $0x8] sm:$0xff]
    %v1752 = vld [vmem:[#allocation6 + $0x10] sm:$0xff]
    %v1753 = vld [vmem:[#allocation6 + $0x18] sm:$0xff]
    %v1754 = vld [vmem:[#allocation6 + $0x20] sm:$0xff]
    %v1755 = vld [vmem:[#allocation6 + $0x28] sm:$0xff]
    %v1756 = vld [vmem:[#allocation6 + $0x30] sm:$0xff]
    %v1757 = vld [vmem:[#allocation6 + $0x38] sm:$0xff]
    %v1758 = vld [vmem:[#allocation6 + $0x40] sm:$0xff]
    %v1759 = vld [vmem:[#allocation6 + $0x48] sm:$0xff]
    %v1760 = vld [vmem:[#allocation6 + $0x50] sm:$0xff]
    %v1761 = vld [vmem:[#allocation6 + $0x58] sm:$0xff]
    %v1762 = vld [vmem:[#allocation6 + $0x60] sm:$0xff]
    %v1763 = vld [vmem:[#allocation6 + $0x68] sm:$0xff]
    %v1764 = vld [vmem:[#allocation6 + $0x70] sm:$0xff]
    %v1765 = vld [vmem:[#allocation6 + $0x78] sm:$0xff]
    %v1766 = vld [vmem:[%s8] sm:$0x3]
    %v1768 = vlaneseq
    %v1769 = vshrl.u32 %v1768, 7
    %v1770 = vsub.s32 0, %v1769
    %v1771 = vrot.slane %v1766, %v1770
    %v1772 = vlaneseq
    %v1773 = vshrl.u32 %v1772, 7
    %v1774 = vsub.s32 1, %v1773
    %v1775 = vrot.slane %v1766, %v1774
    %v1794 = vunpack.c.l.b16 %v1750
    %v1795 = vunpack.c.h.b16 %v1750
    %v1796 = vunpack.c.l.b16 %v1751
    %v1797 = vunpack.c.h.b16 %v1751
    %v1798 = vunpack.c.l.b16 %v1752
    %v1799 = vunpack.c.h.b16 %v1752
    %v1800 = vunpack.c.l.b16 %v1753
    %v1801 = vunpack.c.h.b16 %v1753
    %v1802 = vunpack.c.l.b16 %v1754
    %v1803 = vunpack.c.h.b16 %v1754
    %v1804 = vunpack.c.l.b16 %v1755
    %v1805 = vunpack.c.h.b16 %v1755
    %v1806 = vunpack.c.l.b16 %v1756
    %v1807 = vunpack.c.h.b16 %v1756
    %v1808 = vunpack.c.l.b16 %v1757
    %v1809 = vunpack.c.h.b16 %v1757
    %v1810 = vunpack.c.l.b16 %v1758
    %v1811 = vunpack.c.h.b16 %v1758
    %v1812 = vunpack.c.l.b16 %v1759
    %v1813 = vunpack.c.h.b16 %v1759
    %v1814 = vunpack.c.l.b16 %v1760
    %v1815 = vunpack.c.h.b16 %v1760
    %v1816 = vunpack.c.l.b16 %v1761
    %v1817 = vunpack.c.h.b16 %v1761
    %v1818 = vunpack.c.l.b16 %v1762
    %v1819 = vunpack.c.h.b16 %v1762
    %v1820 = vunpack.c.l.b16 %v1763
    %v1821 = vunpack.c.h.b16 %v1763
    %v1822 = vunpack.c.l.b16 %v1764
    %v1823 = vunpack.c.h.b16 %v1764
    %v1824 = vunpack.c.l.b16 %v1765
    %v1825 = vunpack.c.h.b16 %v1765
    %v1826 = vpack.c.b16 %v1796, %v1794
    %v1827 = vpack.c.b16 %v1797, %v1795
    %v1828 = vpack.c.b16 %v1800, %v1798
    %v1829 = vpack.c.b16 %v1801, %v1799
    %v1830 = vpack.c.b16 %v1804, %v1802
    %v1831 = vpack.c.b16 %v1805, %v1803
    %v1832 = vpack.c.b16 %v1808, %v1806
    %v1833 = vpack.c.b16 %v1809, %v1807
    %v1834 = vpack.c.b16 %v1812, %v1810
    %v1835 = vpack.c.b16 %v1813, %v1811
    %v1836 = vpack.c.b16 %v1816, %v1814
    %v1837 = vpack.c.b16 %v1817, %v1815
    %v1838 = vpack.c.b16 %v1820, %v1818
    %v1839 = vpack.c.b16 %v1821, %v1819
    %v1840 = vpack.c.b16 %v1824, %v1822
    %v1841 = vpack.c.b16 %v1825, %v1823
    %1858 = vmatprep.subr.bf16.mxu0 %v1841
    %1859 = vmatpush1.bf16.msra.mxu0 %v1840
    %1860 = vmatprep.subr.bf16.mxu0 %v1839
    %1861 = vmatpush1.bf16.msra.mxu0 %v1838
    %1862 = vmatprep.subr.bf16.mxu0 %v1837
    %1863 = vmatpush1.bf16.msra.mxu0 %v1836
    %1864 = vmatprep.subr.bf16.mxu0 %v1835
    %1865 = vmatpush1.bf16.msra.mxu0 %v1834
    %1866 = vmatprep.subr.bf16.mxu0 %v1833
    %1867 = vmatpush1.bf16.msra.mxu0 %v1832
    %1868 = vmatprep.subr.bf16.mxu0 %v1831
    %1869 = vmatpush1.bf16.msra.mxu0 %v1830
    %1870 = vmatprep.subr.bf16.mxu0 %v1829
    %1871 = vmatpush1.bf16.msra.mxu0 %v1828
    %1872 = vmatprep.subr.bf16.mxu0 %v1827
    %1873 = vmatpush1.bf16.msra.mxu0 %v1826
    %1874 = vmatprep.subr.bf16.mxu0 0
    %1875 = vmatpush2.bf16.msra.mxu0 0
    %1876 = vmatprep.subr.bf16.mxu0 0
    %1877 = vmatpush2.bf16.msra.mxu0 0
    %1878 = vmatprep.subr.bf16.mxu0 0
    %1879 = vmatpush2.bf16.msra.mxu0 0
    %1880 = vmatprep.subr.bf16.mxu0 0
    %1881 = vmatpush2.bf16.msra.mxu0 0
    %1882 = vmatprep.subr.bf16.mxu0 0
    %1883 = vmatpush2.bf16.msra.mxu0 0
    %1884 = vmatprep.subr.bf16.mxu0 0
    %1885 = vmatpush2.bf16.msra.mxu0 0
    %1886 = vmatprep.subr.bf16.mxu0 0
    %1887 = vmatpush2.bf16.msra.mxu0 0
    %1888 = vmatprep.subr.bf16.mxu0 0
    %1889 = vmatpush2.bf16.msra.mxu0 0
    %1890 = vmatprep.mubr.bf16.mxu0 0
    %1891 = vmatmul.mubr.bf16.gmra.mxu0 %v1749
    %v1892 = vpop.f32.mrf.mxu0
    %v1893 = vadd.f32 %v1771, %v1892
    %v1894 = vpop.f32.mrf.mxu0
    %v1895 = vadd.f32 %v1775, %v1894
    %v1896 = vpop.f32.mrf.mxu0
    %v1897 = vpop.f32.mrf.mxu0
    %1898 = vdwg.mxu0
    %v1899 = vmax.f32 %v1893, 0.0
    %v1900 = vmax.f32 %v1895, 0.0
    %v1901 = vadd.f32 %v1899, %v1569
    %v1902 = vadd.f32 %v1900, %v1570
    %v1903 = vpack.c.bf16 %v1901, %v1901
    %v1904 = vpack.c.bf16 %v1902, %v1902
    %v1905 = vld [vmem:[#allocation7] sm:$0xff]
    %v1906 = vld [vmem:[#allocation7 + $0x8] sm:$0xff]
    %v1907 = vld [vmem:[#allocation7 + $0x10] sm:$0xff]
    %v1908 = vld [vmem:[#allocation7 + $0x18] sm:$0xff]
    %v1909 = vld [vmem:[#allocation7 + $0x20] sm:$0xff]
    %v1910 = vld [vmem:[#allocation7 + $0x28] sm:$0xff]
    %v1911 = vld [vmem:[#allocation7 + $0x30] sm:$0xff]
    %v1912 = vld [vmem:[#allocation7 + $0x38] sm:$0xff]
    %v1913 = vld [vmem:[#allocation7 + $0x40] sm:$0xff]
    %v1914 = vld [vmem:[#allocation7 + $0x48] sm:$0xff]
    %v1915 = vld [vmem:[#allocation7 + $0x50] sm:$0xff]
    %v1916 = vld [vmem:[#allocation7 + $0x58] sm:$0xff]
    %v1917 = vld [vmem:[#allocation7 + $0x60] sm:$0xff]
    %v1918 = vld [vmem:[#allocation7 + $0x68] sm:$0xff]
    %v1919 = vld [vmem:[#allocation7 + $0x70] sm:$0xff]
    %v1920 = vld [vmem:[#allocation7 + $0x78] sm:$0xff]
    %v1921 = vld [vmem:[#allocation7 + $0x80] sm:$0xff]
    %v1922 = vld [vmem:[#allocation7 + $0x88] sm:$0xff]
    %v1923 = vld [vmem:[#allocation7 + $0x90] sm:$0xff]
    %v1924 = vld [vmem:[#allocation7 + $0x98] sm:$0xff]
    %v1925 = vld [vmem:[#allocation7 + $0xa0] sm:$0xff]
    %v1926 = vld [vmem:[#allocation7 + $0xa8] sm:$0xff]
    %v1927 = vld [vmem:[#allocation7 + $0xb0] sm:$0xff]
    %v1928 = vld [vmem:[#allocation7 + $0xb8] sm:$0xff]
    %v1929 = vld [vmem:[#allocation7 + $0xc0] sm:$0xff]
    %v1930 = vld [vmem:[#allocation7 + $0xc8] sm:$0xff]
    %v1931 = vld [vmem:[#allocation7 + $0xd0] sm:$0xff]
    %v1932 = vld [vmem:[#allocation7 + $0xd8] sm:$0xff]
    %v1933 = vld [vmem:[#allocation7 + $0xe0] sm:$0xff]
    %v1934 = vld [vmem:[#allocation7 + $0xe8] sm:$0xff]
    %v1935 = vld [vmem:[#allocation7 + $0xf0] sm:$0xff]
    %v1936 = vld [vmem:[#allocation7 + $0xf8] sm:$0xff]
    %v1937 = vld [vmem:[#allocation7 + $0x100] sm:$0xff]
    %v1938 = vld [vmem:[#allocation7 + $0x108] sm:$0xff]
    %v1939 = vld [vmem:[#allocation7 + $0x110] sm:$0xff]
    %v1940 = vld [vmem:[#allocation7 + $0x118] sm:$0xff]
    %v1941 = vld [vmem:[#allocation7 + $0x120] sm:$0xff]
    %v1942 = vld [vmem:[#allocation7 + $0x128] sm:$0xff]
    %v1943 = vld [vmem:[#allocation7 + $0x130] sm:$0xff]
    %v1944 = vld [vmem:[#allocation7 + $0x138] sm:$0xff]
    %v1945 = vld [vmem:[#allocation7 + $0x140] sm:$0xff]
    %v1946 = vld [vmem:[#allocation7 + $0x148] sm:$0xff]
    %v1947 = vld [vmem:[#allocation7 + $0x150] sm:$0xff]
    %v1948 = vld [vmem:[#allocation7 + $0x158] sm:$0xff]
    %v1949 = vld [vmem:[#allocation7 + $0x160] sm:$0xff]
    %v1950 = vld [vmem:[#allocation7 + $0x168] sm:$0xff]
    %v1951 = vld [vmem:[#allocation7 + $0x170] sm:$0xff]
    %v1952 = vld [vmem:[#allocation7 + $0x178] sm:$0xff]
    %v1953 = vld [vmem:[#allocation7 + $0x180] sm:$0xff]
    %v1954 = vld [vmem:[#allocation7 + $0x188] sm:$0xff]
    %v1955 = vld [vmem:[#allocation7 + $0x190] sm:$0xff]
    %v1956 = vld [vmem:[#allocation7 + $0x198] sm:$0xff]
    %v1957 = vld [vmem:[#allocation7 + $0x1a0] sm:$0xff]
    %v1958 = vld [vmem:[#allocation7 + $0x1a8] sm:$0xff]
    %v1959 = vld [vmem:[#allocation7 + $0x1b0] sm:$0xff]
    %v1960 = vld [vmem:[#allocation7 + $0x1b8] sm:$0xff]
    %v1961 = vld [vmem:[#allocation7 + $0x1c0] sm:$0xff]
    %v1962 = vld [vmem:[#allocation7 + $0x1c8] sm:$0xff]
    %v1963 = vld [vmem:[#allocation7 + $0x1d0] sm:$0xff]
    %v1964 = vld [vmem:[#allocation7 + $0x1d8] sm:$0xff]
    %v1965 = vld [vmem:[#allocation7 + $0x1e0] sm:$0xff]
    %v1966 = vld [vmem:[#allocation7 + $0x1e8] sm:$0xff]
    %v1967 = vld [vmem:[#allocation7 + $0x1f0] sm:$0xff]
    %v1968 = vld [vmem:[#allocation7 + $0x1f8] sm:$0xff]
    %v1969 = vld [vmem:[%s10] sm:$0xf]
    %v1971 = vlaneseq
    %v1972 = vshrl.u32 %v1971, 7
    %v1973 = vsub.s32 0, %v1972
    %v1974 = vrot.slane %v1969, %v1973
    %v1975 = vlaneseq
    %v1976 = vshrl.u32 %v1975, 7
    %v1977 = vsub.s32 1, %v1976
    %v1978 = vrot.slane %v1969, %v1977
    %v1979 = vlaneseq
    %v1980 = vshrl.u32 %v1979, 7
    %v1981 = vsub.s32 2, %v1980
    %v1982 = vrot.slane %v1969, %v1981
    %v1983 = vlaneseq
    %v1984 = vshrl.u32 %v1983, 7
    %v1985 = vsub.s32 3, %v1984
    %v1986 = vrot.slane %v1969, %v1985
    %v2055 = vunpack.c.l.b16 %v1905
    %v2056 = vunpack.c.h.b16 %v1905
    %v2057 = vunpack.c.l.b16 %v1906
    %v2058 = vunpack.c.h.b16 %v1906
    %v2059 = vunpack.c.l.b16 %v1907
    %v2060 = vunpack.c.h.b16 %v1907
    %v2061 = vunpack.c.l.b16 %v1908
    %v2062 = vunpack.c.h.b16 %v1908
    %v2063 = vunpack.c.l.b16 %v1909
    %v2064 = vunpack.c.h.b16 %v1909
    %v2065 = vunpack.c.l.b16 %v1910
    %v2066 = vunpack.c.h.b16 %v1910
    %v2067 = vunpack.c.l.b16 %v1911
    %v2068 = vunpack.c.h.b16 %v1911
    %v2069 = vunpack.c.l.b16 %v1912
    %v2070 = vunpack.c.h.b16 %v1912
    %v2071 = vunpack.c.l.b16 %v1913
    %v2072 = vunpack.c.h.b16 %v1913
    %v2073 = vunpack.c.l.b16 %v1914
    %v2074 = vunpack.c.h.b16 %v1914
    %v2075 = vunpack.c.l.b16 %v1915
    %v2076 = vunpack.c.h.b16 %v1915
    %v2077 = vunpack.c.l.b16 %v1916
    %v2078 = vunpack.c.h.b16 %v1916
    %v2079 = vunpack.c.l.b16 %v1917
    %v2080 = vunpack.c.h.b16 %v1917
    %v2081 = vunpack.c.l.b16 %v1918
    %v2082 = vunpack.c.h.b16 %v1918
    %v2083 = vunpack.c.l.b16 %v1919
    %v2084 = vunpack.c.h.b16 %v1919
    %v2085 = vunpack.c.l.b16 %v1920
    %v2086 = vunpack.c.h.b16 %v1920
    %v2087 = vunpack.c.l.b16 %v1921
    %v2088 = vunpack.c.h.b16 %v1921
    %v2089 = vunpack.c.l.b16 %v1922
    %v2090 = vunpack.c.h.b16 %v1922
    %v2091 = vunpack.c.l.b16 %v1923
    %v2092 = vunpack.c.h.b16 %v1923
    %v2093 = vunpack.c.l.b16 %v1924
    %v2094 = vunpack.c.h.b16 %v1924
    %v2095 = vunpack.c.l.b16 %v1925
    %v2096 = vunpack.c.h.b16 %v1925
    %v2097 = vunpack.c.l.b16 %v1926
    %v2098 = vunpack.c.h.b16 %v1926
    %v2099 = vunpack.c.l.b16 %v1927
    %v2100 = vunpack.c.h.b16 %v1927
    %v2101 = vunpack.c.l.b16 %v1928
    %v2102 = vunpack.c.h.b16 %v1928
    %v2103 = vunpack.c.l.b16 %v1929
    %v2104 = vunpack.c.h.b16 %v1929
    %v2105 = vunpack.c.l.b16 %v1930
    %v2106 = vunpack.c.h.b16 %v1930
    %v2107 = vunpack.c.l.b16 %v1931
    %v2108 = vunpack.c.h.b16 %v1931
    %v2109 = vunpack.c.l.b16 %v1932
    %v2110 = vunpack.c.h.b16 %v1932
    %v2111 = vunpack.c.l.b16 %v1933
    %v2112 = vunpack.c.h.b16 %v1933
    %v2113 = vunpack.c.l.b16 %v1934
    %v2114 = vunpack.c.h.b16 %v1934
    %v2115 = vunpack.c.l.b16 %v1935
    %v2116 = vunpack.c.h.b16 %v1935
    %v2117 = vunpack.c.l.b16 %v1936
    %v2118 = vunpack.c.h.b16 %v1936
    %v2119 = vunpack.c.l.b16 %v1937
    %v2120 = vunpack.c.h.b16 %v1937
    %v2121 = vunpack.c.l.b16 %v1938
    %v2122 = vunpack.c.h.b16 %v1938
    %v2123 = vunpack.c.l.b16 %v1939
    %v2124 = vunpack.c.h.b16 %v1939
    %v2125 = vunpack.c.l.b16 %v1940
    %v2126 = vunpack.c.h.b16 %v1940
    %v2127 = vunpack.c.l.b16 %v1941
    %v2128 = vunpack.c.h.b16 %v1941
    %v2129 = vunpack.c.l.b16 %v1942
    %v2130 = vunpack.c.h.b16 %v1942
    %v2131 = vunpack.c.l.b16 %v1943
    %v2132 = vunpack.c.h.b16 %v1943
    %v2133 = vunpack.c.l.b16 %v1944
    %v2134 = vunpack.c.h.b16 %v1944
    %v2135 = vunpack.c.l.b16 %v1945
    %v2136 = vunpack.c.h.b16 %v1945
    %v2137 = vunpack.c.l.b16 %v1946
    %v2138 = vunpack.c.h.b16 %v1946
    %v2139 = vunpack.c.l.b16 %v1947
    %v2140 = vunpack.c.h.b16 %v1947
    %v2141 = vunpack.c.l.b16 %v1948
    %v2142 = vunpack.c.h.b16 %v1948
    %v2143 = vunpack.c.l.b16 %v1949
    %v2144 = vunpack.c.h.b16 %v1949
    %v2145 = vunpack.c.l.b16 %v1950
    %v2146 = vunpack.c.h.b16 %v1950
    %v2147 = vunpack.c.l.b16 %v1951
    %v2148 = vunpack.c.h.b16 %v1951
    %v2149 = vunpack.c.l.b16 %v1952
    %v2150 = vunpack.c.h.b16 %v1952
    %v2151 = vunpack.c.l.b16 %v1953
    %v2152 = vunpack.c.h.b16 %v1953
    %v2153 = vunpack.c.l.b16 %v1954
    %v2154 = vunpack.c.h.b16 %v1954
    %v2155 = vunpack.c.l.b16 %v1955
    %v2156 = vunpack.c.h.b16 %v1955
    %v2157 = vunpack.c.l.b16 %v1956
    %v2158 = vunpack.c.h.b16 %v1956
    %v2159 = vunpack.c.l.b16 %v1957
    %v2160 = vunpack.c.h.b16 %v1957
    %v2161 = vunpack.c.l.b16 %v1958
    %v2162 = vunpack.c.h.b16 %v1958
    %v2163 = vunpack.c.l.b16 %v1959
    %v2164 = vunpack.c.h.b16 %v1959
    %v2165 = vunpack.c.l.b16 %v1960
    %v2166 = vunpack.c.h.b16 %v1960
    %v2167 = vunpack.c.l.b16 %v1961
    %v2168 = vunpack.c.h.b16 %v1961
    %v2169 = vunpack.c.l.b16 %v1962
    %v2170 = vunpack.c.h.b16 %v1962
    %v2171 = vunpack.c.l.b16 %v1963
    %v2172 = vunpack.c.h.b16 %v1963
    %v2173 = vunpack.c.l.b16 %v1964
    %v2174 = vunpack.c.h.b16 %v1964
    %v2175 = vunpack.c.l.b16 %v1965
    %v2176 = vunpack.c.h.b16 %v1965
    %v2177 = vunpack.c.l.b16 %v1966
    %v2178 = vunpack.c.h.b16 %v1966
    %v2179 = vunpack.c.l.b16 %v1967
    %v2180 = vunpack.c.h.b16 %v1967
    %v2181 = vunpack.c.l.b16 %v1968
    %v2182 = vunpack.c.h.b16 %v1968
    %v2183 = vpack.c.b16 %v2059, %v2055
    %v2184 = vpack.c.b16 %v2060, %v2056
    %v2185 = vpack.c.b16 %v2061, %v2057
    %v2186 = vpack.c.b16 %v2062, %v2058
    %v2187 = vpack.c.b16 %v2067, %v2063
    %v2188 = vpack.c.b16 %v2068, %v2064
    %v2189 = vpack.c.b16 %v2069, %v2065
    %v2190 = vpack.c.b16 %v2070, %v2066
    %v2191 = vpack.c.b16 %v2075, %v2071
    %v2192 = vpack.c.b16 %v2076, %v2072
    %v2193 = vpack.c.b16 %v2077, %v2073
    %v2194 = vpack.c.b16 %v2078, %v2074
    %v2195 = vpack.c.b16 %v2083, %v2079
    %v2196 = vpack.c.b16 %v2084, %v2080
    %v2197 = vpack.c.b16 %v2085, %v2081
    %v2198 = vpack.c.b16 %v2086, %v2082
    %v2199 = vpack.c.b16 %v2091, %v2087
    %v2200 = vpack.c.b16 %v2092, %v2088
    %v2201 = vpack.c.b16 %v2093, %v2089
    %v2202 = vpack.c.b16 %v2094, %v2090
    %v2203 = vpack.c.b16 %v2099, %v2095
    %v2204 = vpack.c.b16 %v2100, %v2096
    %v2205 = vpack.c.b16 %v2101, %v2097
    %v2206 = vpack.c.b16 %v2102, %v2098
    %v2207 = vpack.c.b16 %v2107, %v2103
    %v2208 = vpack.c.b16 %v2108, %v2104
    %v2209 = vpack.c.b16 %v2109, %v2105
    %v2210 = vpack.c.b16 %v2110, %v2106
    %v2211 = vpack.c.b16 %v2115, %v2111
    %v2212 = vpack.c.b16 %v2116, %v2112
    %v2213 = vpack.c.b16 %v2117, %v2113
    %v2214 = vpack.c.b16 %v2118, %v2114
    %v2215 = vpack.c.b16 %v2123, %v2119
    %v2216 = vpack.c.b16 %v2124, %v2120
    %v2217 = vpack.c.b16 %v2125, %v2121
    %v2218 = vpack.c.b16 %v2126, %v2122
    %v2219 = vpack.c.b16 %v2131, %v2127
    %v2220 = vpack.c.b16 %v2132, %v2128
    %v2221 = vpack.c.b16 %v2133, %v2129
    %v2222 = vpack.c.b16 %v2134, %v2130
    %v2223 = vpack.c.b16 %v2139, %v2135
    %v2224 = vpack.c.b16 %v2140, %v2136
    %v2225 = vpack.c.b16 %v2141, %v2137
    %v2226 = vpack.c.b16 %v2142, %v2138
    %v2227 = vpack.c.b16 %v2147, %v2143
    %v2228 = vpack.c.b16 %v2148, %v2144
    %v2229 = vpack.c.b16 %v2149, %v2145
    %v2230 = vpack.c.b16 %v2150, %v2146
    %v2231 = vpack.c.b16 %v2155, %v2151
    %v2232 = vpack.c.b16 %v2156, %v2152
    %v2233 = vpack.c.b16 %v2157, %v2153
    %v2234 = vpack.c.b16 %v2158, %v2154
    %v2235 = vpack.c.b16 %v2163, %v2159
    %v2236 = vpack.c.b16 %v2164, %v2160
    %v2237 = vpack.c.b16 %v2165, %v2161
    %v2238 = vpack.c.b16 %v2166, %v2162
    %v2239 = vpack.c.b16 %v2171, %v2167
    %v2240 = vpack.c.b16 %v2172, %v2168
    %v2241 = vpack.c.b16 %v2173, %v2169
    %v2242 = vpack.c.b16 %v2174, %v2170
    %v2243 = vpack.c.b16 %v2179, %v2175
    %v2244 = vpack.c.b16 %v2180, %v2176
    %v2245 = vpack.c.b16 %v2181, %v2177
    %v2246 = vpack.c.b16 %v2182, %v2178
    %2311 = vmatprep.subr.bf16.mxu0 %v2212
    %2312 = vmatpush1.bf16.msra.mxu0 %v2211
    %2313 = vmatprep.subr.bf16.mxu0 %v2208
    %2314 = vmatpush1.bf16.msra.mxu0 %v2207
    %2315 = vmatprep.subr.bf16.mxu0 %v2204
    %2316 = vmatpush1.bf16.msra.mxu0 %v2203
    %2317 = vmatprep.subr.bf16.mxu0 %v2200
    %2318 = vmatpush1.bf16.msra.mxu0 %v2199
    %2319 = vmatprep.subr.bf16.mxu0 %v2196
    %2320 = vmatpush1.bf16.msra.mxu0 %v2195
    %2321 = vmatprep.subr.bf16.mxu0 %v2192
    %2322 = vmatpush1.bf16.msra.mxu0 %v2191
    %2323 = vmatprep.subr.bf16.mxu0 %v2188
    %2324 = vmatpush1.bf16.msra.mxu0 %v2187
    %2325 = vmatprep.subr.bf16.mxu0 %v2184
    %2326 = vmatpush1.bf16.msra.mxu0 %v2183
    %2327 = vmatprep.subr.bf16.mxu0 %v2244
    %2328 = vmatpush2.bf16.msra.mxu0 %v2243
    %2329 = vmatprep.subr.bf16.mxu0 %v2240
    %2330 = vmatpush2.bf16.msra.mxu0 %v2239
    %2331 = vmatprep.subr.bf16.mxu0 %v2236
    %2332 = vmatpush2.bf16.msra.mxu0 %v2235
    %2333 = vmatprep.subr.bf16.mxu0 %v2232
    %2334 = vmatpush2.bf16.msra.mxu0 %v2231
    %2335 = vmatprep.subr.bf16.mxu0 %v2228
    %2336 = vmatpush2.bf16.msra.mxu0 %v2227
    %2337 = vmatprep.subr.bf16.mxu0 %v2224
    %2338 = vmatpush2.bf16.msra.mxu0 %v2223
    %2339 = vmatprep.subr.bf16.mxu0 %v2220
    %2340 = vmatpush2.bf16.msra.mxu0 %v2219
    %2341 = vmatprep.subr.bf16.mxu0 %v2216
    %2342 = vmatpush2.bf16.msra.mxu0 %v2215
    %2343 = vmatprep.mubr.bf16.mxu0 %v1904
    %2344 = vmatmul.mubr.bf16.gmra.mxu0 %v1903
    %v2345 = vpop.f32.mrf.mxu0
    %v2346 = vadd.f32 %v1974, %v2345
    %v2347 = vpop.f32.mrf.mxu0
    %v2348 = vadd.f32 %v1978, %v2347
    %v2349 = vpop.f32.mrf.mxu0
    %v2350 = vpop.f32.mrf.mxu0
    %2351 = vdwg.mxu0
    %2352 = vmatprep.subr.bf16.mxu0 %v2214
    %2353 = vmatpush1.bf16.msra.mxu0 %v2213
    %2354 = vmatprep.subr.bf16.mxu0 %v2210
    %2355 = vmatpush1.bf16.msra.mxu0 %v2209
    %2356 = vmatprep.subr.bf16.mxu0 %v2206
    %2357 = vmatpush1.bf16.msra.mxu0 %v2205
    %2358 = vmatprep.subr.bf16.mxu0 %v2202
    %2359 = vmatpush1.bf16.msra.mxu0 %v2201
    %2360 = vmatprep.subr.bf16.mxu0 %v2198
    %2361 = vmatpush1.bf16.msra.mxu0 %v2197
    %2362 = vmatprep.subr.bf16.mxu0 %v2194
    %2363 = vmatpush1.bf16.msra.mxu0 %v2193
    %2364 = vmatprep.subr.bf16.mxu0 %v2190
    %2365 = vmatpush1.bf16.msra.mxu0 %v2189
    %2366 = vmatprep.subr.bf16.mxu0 %v2186
    %2367 = vmatpush1.bf16.msra.mxu0 %v2185
    %2368 = vmatprep.subr.bf16.mxu0 %v2246
    %2369 = vmatpush2.bf16.msra.mxu0 %v2245
    %2370 = vmatprep.subr.bf16.mxu0 %v2242
    %2371 = vmatpush2.bf16.msra.mxu0 %v2241
    %2372 = vmatprep.subr.bf16.mxu0 %v2238
    %2373 = vmatpush2.bf16.msra.mxu0 %v2237
    %2374 = vmatprep.subr.bf16.mxu0 %v2234
    %2375 = vmatpush2.bf16.msra.mxu0 %v2233
    %2376 = vmatprep.subr.bf16.mxu0 %v2230
    %2377 = vmatpush2.bf16.msra.mxu0 %v2229
    %2378 = vmatprep.subr.bf16.mxu0 %v2226
    %2379 = vmatpush2.bf16.msra.mxu0 %v2225
    %2380 = vmatprep.subr.bf16.mxu0 %v2222
    %2381 = vmatpush2.bf16.msra.mxu0 %v2221
    %2382 = vmatprep.subr.bf16.mxu0 %v2218
    %2383 = vmatpush2.bf16.msra.mxu0 %v2217
    %2384 = vmatprep.mubr.bf16.mxu0 %v1904
    %2385 = vmatmul.mubr.bf16.gmra.mxu0 %v1903
    %v2386 = vpop.f32.mrf.mxu0
    %v2387 = vadd.f32 %v1982, %v2386
    %v2388 = vpop.f32.mrf.mxu0
    %v2389 = vadd.f32 %v1986, %v2388
    %v2390 = vpop.f32.mrf.mxu0
    %v2391 = vpop.f32.mrf.mxu0
    %2392 = vdwg.mxu0
    %v2393 = vmax.f32 %v2346, 0.0
    %v2394 = vmax.f32 %v2348, 0.0
    %v2395 = vmax.f32 %v2387, 0.0
    %v2396 = vmax.f32 %v2389, 0.0
    %v2397 = vadd.f32 %v2393, %v1083
    %v2398 = vadd.f32 %v2394, %v1084
    %v2399 = vadd.f32 %v2395, %v1085
    %v2400 = vadd.f32 %v2396, %v1086
    %v2401 = vpack.c.bf16 %v2397, %v2397
    %v2402 = vpack.c.bf16 %v2398, %v2398
    %v2403 = vpack.c.bf16 %v2399, %v2399
    %v2404 = vpack.c.bf16 %v2400, %v2400
    %v2405 = vld [vmem:[#allocation9] sm:$0xff]
    %v2406 = vld [vmem:[#allocation9 + $0x8] sm:$0xff]
    %v2407 = vld [vmem:[#allocation9 + $0x10] sm:$0xff]
    %v2408 = vld [vmem:[#allocation9 + $0x18] sm:$0xff]
    %v2409 = vld [vmem:[#allocation9 + $0x20] sm:$0xff]
    %v2410 = vld [vmem:[#allocation9 + $0x28] sm:$0xff]
    %v2411 = vld [vmem:[#allocation9 + $0x30] sm:$0xff]
    %v2412 = vld [vmem:[#allocation9 + $0x38] sm:$0xff]
    %v2413 = vld [vmem:[#allocation9 + $0x40] sm:$0xff]
    %v2414 = vld [vmem:[#allocation9 + $0x48] sm:$0xff]
    %v2415 = vld [vmem:[#allocation9 + $0x50] sm:$0xff]
    %v2416 = vld [vmem:[#allocation9 + $0x58] sm:$0xff]
    %v2417 = vld [vmem:[#allocation9 + $0x60] sm:$0xff]
    %v2418 = vld [vmem:[#allocation9 + $0x68] sm:$0xff]
    %v2419 = vld [vmem:[#allocation9 + $0x70] sm:$0xff]
    %v2420 = vld [vmem:[#allocation9 + $0x78] sm:$0xff]
    %v2421 = vld [vmem:[#allocation9 + $0x80] sm:$0xff]
    %v2422 = vld [vmem:[#allocation9 + $0x88] sm:$0xff]
    %v2423 = vld [vmem:[#allocation9 + $0x90] sm:$0xff]
    %v2424 = vld [vmem:[#allocation9 + $0x98] sm:$0xff]
    %v2425 = vld [vmem:[#allocation9 + $0xa0] sm:$0xff]
    %v2426 = vld [vmem:[#allocation9 + $0xa8] sm:$0xff]
    %v2427 = vld [vmem:[#allocation9 + $0xb0] sm:$0xff]
    %v2428 = vld [vmem:[#allocation9 + $0xb8] sm:$0xff]
    %v2429 = vld [vmem:[#allocation9 + $0xc0] sm:$0xff]
    %v2430 = vld [vmem:[#allocation9 + $0xc8] sm:$0xff]
    %v2431 = vld [vmem:[#allocation9 + $0xd0] sm:$0xff]
    %v2432 = vld [vmem:[#allocation9 + $0xd8] sm:$0xff]
    %v2433 = vld [vmem:[#allocation9 + $0xe0] sm:$0xff]
    %v2434 = vld [vmem:[#allocation9 + $0xe8] sm:$0xff]
    %v2435 = vld [vmem:[#allocation9 + $0xf0] sm:$0xff]
    %v2436 = vld [vmem:[#allocation9 + $0xf8] sm:$0xff]
    %v2437 = vld [vmem:[#allocation9 + $0x100] sm:$0xff]
    %v2438 = vld [vmem:[#allocation9 + $0x108] sm:$0xff]
    %v2439 = vld [vmem:[#allocation9 + $0x110] sm:$0xff]
    %v2440 = vld [vmem:[#allocation9 + $0x118] sm:$0xff]
    %v2441 = vld [vmem:[#allocation9 + $0x120] sm:$0xff]
    %v2442 = vld [vmem:[#allocation9 + $0x128] sm:$0xff]
    %v2443 = vld [vmem:[#allocation9 + $0x130] sm:$0xff]
    %v2444 = vld [vmem:[#allocation9 + $0x138] sm:$0xff]
    %v2445 = vld [vmem:[#allocation9 + $0x140] sm:$0xff]
    %v2446 = vld [vmem:[#allocation9 + $0x148] sm:$0xff]
    %v2447 = vld [vmem:[#allocation9 + $0x150] sm:$0xff]
    %v2448 = vld [vmem:[#allocation9 + $0x158] sm:$0xff]
    %v2449 = vld [vmem:[#allocation9 + $0x160] sm:$0xff]
    %v2450 = vld [vmem:[#allocation9 + $0x168] sm:$0xff]
    %v2451 = vld [vmem:[#allocation9 + $0x170] sm:$0xff]
    %v2452 = vld [vmem:[#allocation9 + $0x178] sm:$0xff]
    %v2453 = vld [vmem:[#allocation9 + $0x180] sm:$0xff]
    %v2454 = vld [vmem:[#allocation9 + $0x188] sm:$0xff]
    %v2455 = vld [vmem:[#allocation9 + $0x190] sm:$0xff]
    %v2456 = vld [vmem:[#allocation9 + $0x198] sm:$0xff]
    %v2457 = vld [vmem:[#allocation9 + $0x1a0] sm:$0xff]
    %v2458 = vld [vmem:[#allocation9 + $0x1a8] sm:$0xff]
    %v2459 = vld [vmem:[#allocation9 + $0x1b0] sm:$0xff]
    %v2460 = vld [vmem:[#allocation9 + $0x1b8] sm:$0xff]
    %v2461 = vld [vmem:[#allocation9 + $0x1c0] sm:$0xff]
    %v2462 = vld [vmem:[#allocation9 + $0x1c8] sm:$0xff]
    %v2463 = vld [vmem:[#allocation9 + $0x1d0] sm:$0xff]
    %v2464 = vld [vmem:[#allocation9 + $0x1d8] sm:$0xff]
    %v2465 = vld [vmem:[#allocation9 + $0x1e0] sm:$0xff]
    %v2466 = vld [vmem:[#allocation9 + $0x1e8] sm:$0xff]
    %v2467 = vld [vmem:[#allocation9 + $0x1f0] sm:$0xff]
    %v2468 = vld [vmem:[#allocation9 + $0x1f8] sm:$0xff]
    %v2469 = vld [vmem:[#allocation9 + $0x200] sm:$0xff]
    %v2470 = vld [vmem:[#allocation9 + $0x208] sm:$0xff]
    %v2471 = vld [vmem:[#allocation9 + $0x210] sm:$0xff]
    %v2472 = vld [vmem:[#allocation9 + $0x218] sm:$0xff]
    %v2473 = vld [vmem:[#allocation9 + $0x220] sm:$0xff]
    %v2474 = vld [vmem:[#allocation9 + $0x228] sm:$0xff]
    %v2475 = vld [vmem:[#allocation9 + $0x230] sm:$0xff]
    %v2476 = vld [vmem:[#allocation9 + $0x238] sm:$0xff]
    %v2477 = vld [vmem:[#allocation9 + $0x240] sm:$0xff]
    %v2478 = vld [vmem:[#allocation9 + $0x248] sm:$0xff]
    %v2479 = vld [vmem:[#allocation9 + $0x250] sm:$0xff]
    %v2480 = vld [vmem:[#allocation9 + $0x258] sm:$0xff]
    %v2481 = vld [vmem:[#allocation9 + $0x260] sm:$0xff]
    %v2482 = vld [vmem:[#allocation9 + $0x268] sm:$0xff]
    %v2483 = vld [vmem:[#allocation9 + $0x270] sm:$0xff]
    %v2484 = vld [vmem:[#allocation9 + $0x278] sm:$0xff]
    %v2485 = vld [vmem:[#allocation9 + $0x280] sm:$0xff]
    %v2486 = vld [vmem:[#allocation9 + $0x288] sm:$0xff]
    %v2487 = vld [vmem:[#allocation9 + $0x290] sm:$0xff]
    %v2488 = vld [vmem:[#allocation9 + $0x298] sm:$0xff]
    %v2489 = vld [vmem:[#allocation9 + $0x2a0] sm:$0xff]
    %v2490 = vld [vmem:[#allocation9 + $0x2a8] sm:$0xff]
    %v2491 = vld [vmem:[#allocation9 + $0x2b0] sm:$0xff]
    %v2492 = vld [vmem:[#allocation9 + $0x2b8] sm:$0xff]
    %v2493 = vld [vmem:[#allocation9 + $0x2c0] sm:$0xff]
    %v2494 = vld [vmem:[#allocation9 + $0x2c8] sm:$0xff]
    %v2495 = vld [vmem:[#allocation9 + $0x2d0] sm:$0xff]
    %v2496 = vld [vmem:[#allocation9 + $0x2d8] sm:$0xff]
    %v2497 = vld [vmem:[#allocation9 + $0x2e0] sm:$0xff]
    %v2498 = vld [vmem:[#allocation9 + $0x2e8] sm:$0xff]
    %v2499 = vld [vmem:[#allocation9 + $0x2f0] sm:$0xff]
    %v2500 = vld [vmem:[#allocation9 + $0x2f8] sm:$0xff]
    %v2501 = vld [vmem:[#allocation9 + $0x300] sm:$0xff]
    %v2502 = vld [vmem:[#allocation9 + $0x308] sm:$0xff]
    %v2503 = vld [vmem:[#allocation9 + $0x310] sm:$0xff]
    %v2504 = vld [vmem:[#allocation9 + $0x318] sm:$0xff]
    %v2505 = vld [vmem:[#allocation9 + $0x320] sm:$0xff]
    %v2506 = vld [vmem:[#allocation9 + $0x328] sm:$0xff]
    %v2507 = vld [vmem:[#allocation9 + $0x330] sm:$0xff]
    %v2508 = vld [vmem:[#allocation9 + $0x338] sm:$0xff]
    %v2509 = vld [vmem:[#allocation9 + $0x340] sm:$0xff]
    %v2510 = vld [vmem:[#allocation9 + $0x348] sm:$0xff]
    %v2511 = vld [vmem:[#allocation9 + $0x350] sm:$0xff]
    %v2512 = vld [vmem:[#allocation9 + $0x358] sm:$0xff]
    %v2513 = vld [vmem:[#allocation9 + $0x360] sm:$0xff]
    %v2514 = vld [vmem:[#allocation9 + $0x368] sm:$0xff]
    %v2515 = vld [vmem:[#allocation9 + $0x370] sm:$0xff]
    %v2516 = vld [vmem:[#allocation9 + $0x378] sm:$0xff]
    %v2517 = vld [vmem:[#allocation9 + $0x380] sm:$0xff]
    %v2518 = vld [vmem:[#allocation9 + $0x388] sm:$0xff]
    %v2519 = vld [vmem:[#allocation9 + $0x390] sm:$0xff]
    %v2520 = vld [vmem:[#allocation9 + $0x398] sm:$0xff]
    %v2521 = vld [vmem:[#allocation9 + $0x3a0] sm:$0xff]
    %v2522 = vld [vmem:[#allocation9 + $0x3a8] sm:$0xff]
    %v2523 = vld [vmem:[#allocation9 + $0x3b0] sm:$0xff]
    %v2524 = vld [vmem:[#allocation9 + $0x3b8] sm:$0xff]
    %v2525 = vld [vmem:[#allocation9 + $0x3c0] sm:$0xff]
    %v2526 = vld [vmem:[#allocation9 + $0x3c8] sm:$0xff]
    %v2527 = vld [vmem:[#allocation9 + $0x3d0] sm:$0xff]
    %v2528 = vld [vmem:[#allocation9 + $0x3d8] sm:$0xff]
    %v2529 = vld [vmem:[#allocation9 + $0x3e0] sm:$0xff]
    %v2530 = vld [vmem:[#allocation9 + $0x3e8] sm:$0xff]
    %v2531 = vld [vmem:[#allocation9 + $0x3f0] sm:$0xff]
    %v2532 = vld [vmem:[#allocation9 + $0x3f8] sm:$0xff]
    %v2533 = vld [vmem:[%s12] sm:$0xf]
    %v2535 = vlaneseq
    %v2536 = vshrl.u32 %v2535, 7
    %v2537 = vsub.s32 0, %v2536
    %v2538 = vrot.slane %v2533, %v2537
    %v2539 = vlaneseq
    %v2540 = vshrl.u32 %v2539, 7
    %v2541 = vsub.s32 1, %v2540
    %v2542 = vrot.slane %v2533, %v2541
    %v2543 = vlaneseq
    %v2544 = vshrl.u32 %v2543, 7
    %v2545 = vsub.s32 2, %v2544
    %v2546 = vrot.slane %v2533, %v2545
    %v2547 = vlaneseq
    %v2548 = vshrl.u32 %v2547, 7
    %v2549 = vsub.s32 3, %v2548
    %v2550 = vrot.slane %v2533, %v2549
    %v2683 = vunpack.c.l.b16 %v2405
    %v2684 = vunpack.c.h.b16 %v2405
    %v2685 = vunpack.c.l.b16 %v2406
    %v2686 = vunpack.c.h.b16 %v2406
    %v2687 = vunpack.c.l.b16 %v2407
    %v2688 = vunpack.c.h.b16 %v2407
    %v2689 = vunpack.c.l.b16 %v2408
    %v2690 = vunpack.c.h.b16 %v2408
    %v2691 = vunpack.c.l.b16 %v2409
    %v2692 = vunpack.c.h.b16 %v2409
    %v2693 = vunpack.c.l.b16 %v2410
    %v2694 = vunpack.c.h.b16 %v2410
    %v2695 = vunpack.c.l.b16 %v2411
    %v2696 = vunpack.c.h.b16 %v2411
    %v2697 = vunpack.c.l.b16 %v2412
    %v2698 = vunpack.c.h.b16 %v2412
    %v2699 = vunpack.c.l.b16 %v2413
    %v2700 = vunpack.c.h.b16 %v2413
    %v2701 = vunpack.c.l.b16 %v2414
    %v2702 = vunpack.c.h.b16 %v2414
    %v2703 = vunpack.c.l.b16 %v2415
    %v2704 = vunpack.c.h.b16 %v2415
    %v2705 = vunpack.c.l.b16 %v2416
    %v2706 = vunpack.c.h.b16 %v2416
    %v2707 = vunpack.c.l.b16 %v2417
    %v2708 = vunpack.c.h.b16 %v2417
    %v2709 = vunpack.c.l.b16 %v2418
    %v2710 = vunpack.c.h.b16 %v2418
    %v2711 = vunpack.c.l.b16 %v2419
    %v2712 = vunpack.c.h.b16 %v2419
    %v2713 = vunpack.c.l.b16 %v2420
    %v2714 = vunpack.c.h.b16 %v2420
    %v2715 = vunpack.c.l.b16 %v2421
    %v2716 = vunpack.c.h.b16 %v2421
    %v2717 = vunpack.c.l.b16 %v2422
    %v2718 = vunpack.c.h.b16 %v2422
    %v2719 = vunpack.c.l.b16 %v2423
    %v2720 = vunpack.c.h.b16 %v2423
    %v2721 = vunpack.c.l.b16 %v2424
    %v2722 = vunpack.c.h.b16 %v2424
    %v2723 = vunpack.c.l.b16 %v2425
    %v2724 = vunpack.c.h.b16 %v2425
    %v2725 = vunpack.c.l.b16 %v2426
    %v2726 = vunpack.c.h.b16 %v2426
    %v2727 = vunpack.c.l.b16 %v2427
    %v2728 = vunpack.c.h.b16 %v2427
    %v2729 = vunpack.c.l.b16 %v2428
    %v2730 = vunpack.c.h.b16 %v2428
    %v2731 = vunpack.c.l.b16 %v2429
    %v2732 = vunpack.c.h.b16 %v2429
    %v2733 = vunpack.c.l.b16 %v2430
    %v2734 = vunpack.c.h.b16 %v2430
    %v2735 = vunpack.c.l.b16 %v2431
    %v2736 = vunpack.c.h.b16 %v2431
    %v2737 = vunpack.c.l.b16 %v2432
    %v2738 = vunpack.c.h.b16 %v2432
    %v2739 = vunpack.c.l.b16 %v2433
    %v2740 = vunpack.c.h.b16 %v2433
    %v2741 = vunpack.c.l.b16 %v2434
    %v2742 = vunpack.c.h.b16 %v2434
    %v2743 = vunpack.c.l.b16 %v2435
    %v2744 = vunpack.c.h.b16 %v2435
    %v2745 = vunpack.c.l.b16 %v2436
    %v2746 = vunpack.c.h.b16 %v2436
    %v2747 = vunpack.c.l.b16 %v2437
    %v2748 = vunpack.c.h.b16 %v2437
    %v2749 = vunpack.c.l.b16 %v2438
    %v2750 = vunpack.c.h.b16 %v2438
    %v2751 = vunpack.c.l.b16 %v2439
    %v2752 = vunpack.c.h.b16 %v2439
    %v2753 = vunpack.c.l.b16 %v2440
    %v2754 = vunpack.c.h.b16 %v2440
    %v2755 = vunpack.c.l.b16 %v2441
    %v2756 = vunpack.c.h.b16 %v2441
    %v2757 = vunpack.c.l.b16 %v2442
    %v2758 = vunpack.c.h.b16 %v2442
    %v2759 = vunpack.c.l.b16 %v2443
    %v2760 = vunpack.c.h.b16 %v2443
    %v2761 = vunpack.c.l.b16 %v2444
    %v2762 = vunpack.c.h.b16 %v2444
    %v2763 = vunpack.c.l.b16 %v2445
    %v2764 = vunpack.c.h.b16 %v2445
    %v2765 = vunpack.c.l.b16 %v2446
    %v2766 = vunpack.c.h.b16 %v2446
    %v2767 = vunpack.c.l.b16 %v2447
    %v2768 = vunpack.c.h.b16 %v2447
    %v2769 = vunpack.c.l.b16 %v2448
    %v2770 = vunpack.c.h.b16 %v2448
    %v2771 = vunpack.c.l.b16 %v2449
    %v2772 = vunpack.c.h.b16 %v2449
    %v2773 = vunpack.c.l.b16 %v2450
    %v2774 = vunpack.c.h.b16 %v2450
    %v2775 = vunpack.c.l.b16 %v2451
    %v2776 = vunpack.c.h.b16 %v2451
    %v2777 = vunpack.c.l.b16 %v2452
    %v2778 = vunpack.c.h.b16 %v2452
    %v2779 = vunpack.c.l.b16 %v2453
    %v2780 = vunpack.c.h.b16 %v2453
    %v2781 = vunpack.c.l.b16 %v2454
    %v2782 = vunpack.c.h.b16 %v2454
    %v2783 = vunpack.c.l.b16 %v2455
    %v2784 = vunpack.c.h.b16 %v2455
    %v2785 = vunpack.c.l.b16 %v2456
    %v2786 = vunpack.c.h.b16 %v2456
    %v2787 = vunpack.c.l.b16 %v2457
    %v2788 = vunpack.c.h.b16 %v2457
    %v2789 = vunpack.c.l.b16 %v2458
    %v2790 = vunpack.c.h.b16 %v2458
    %v2791 = vunpack.c.l.b16 %v2459
    %v2792 = vunpack.c.h.b16 %v2459
    %v2793 = vunpack.c.l.b16 %v2460
    %v2794 = vunpack.c.h.b16 %v2460
    %v2795 = vunpack.c.l.b16 %v2461
    %v2796 = vunpack.c.h.b16 %v2461
    %v2797 = vunpack.c.l.b16 %v2462
    %v2798 = vunpack.c.h.b16 %v2462
    %v2799 = vunpack.c.l.b16 %v2463
    %v2800 = vunpack.c.h.b16 %v2463
    %v2801 = vunpack.c.l.b16 %v2464
    %v2802 = vunpack.c.h.b16 %v2464
    %v2803 = vunpack.c.l.b16 %v2465
    %v2804 = vunpack.c.h.b16 %v2465
    %v2805 = vunpack.c.l.b16 %v2466
    %v2806 = vunpack.c.h.b16 %v2466
    %v2807 = vunpack.c.l.b16 %v2467
    %v2808 = vunpack.c.h.b16 %v2467
    %v2809 = vunpack.c.l.b16 %v2468
    %v2810 = vunpack.c.h.b16 %v2468
    %v2811 = vunpack.c.l.b16 %v2469
    %v2812 = vunpack.c.h.b16 %v2469
    %v2813 = vunpack.c.l.b16 %v2470
    %v2814 = vunpack.c.h.b16 %v2470
    %v2815 = vunpack.c.l.b16 %v2471
    %v2816 = vunpack.c.h.b16 %v2471
    %v2817 = vunpack.c.l.b16 %v2472
    %v2818 = vunpack.c.h.b16 %v2472
    %v2819 = vunpack.c.l.b16 %v2473
    %v2820 = vunpack.c.h.b16 %v2473
    %v2821 = vunpack.c.l.b16 %v2474
    %v2822 = vunpack.c.h.b16 %v2474
    %v2823 = vunpack.c.l.b16 %v2475
    %v2824 = vunpack.c.h.b16 %v2475
    %v2825 = vunpack.c.l.b16 %v2476
    %v2826 = vunpack.c.h.b16 %v2476
    %v2827 = vunpack.c.l.b16 %v2477
    %v2828 = vunpack.c.h.b16 %v2477
    %v2829 = vunpack.c.l.b16 %v2478
    %v2830 = vunpack.c.h.b16 %v2478
    %v2831 = vunpack.c.l.b16 %v2479
    %v2832 = vunpack.c.h.b16 %v2479
    %v2833 = vunpack.c.l.b16 %v2480
    %v2834 = vunpack.c.h.b16 %v2480
    %v2835 = vunpack.c.l.b16 %v2481
    %v2836 = vunpack.c.h.b16 %v2481
    %v2837 = vunpack.c.l.b16 %v2482
    %v2838 = vunpack.c.h.b16 %v2482
    %v2839 = vunpack.c.l.b16 %v2483
    %v2840 = vunpack.c.h.b16 %v2483
    %v2841 = vunpack.c.l.b16 %v2484
    %v2842 = vunpack.c.h.b16 %v2484
    %v2843 = vunpack.c.l.b16 %v2485
    %v2844 = vunpack.c.h.b16 %v2485
    %v2845 = vunpack.c.l.b16 %v2486
    %v2846 = vunpack.c.h.b16 %v2486
    %v2847 = vunpack.c.l.b16 %v2487
    %v2848 = vunpack.c.h.b16 %v2487
    %v2849 = vunpack.c.l.b16 %v2488
    %v2850 = vunpack.c.h.b16 %v2488
    %v2851 = vunpack.c.l.b16 %v2489
    %v2852 = vunpack.c.h.b16 %v2489
    %v2853 = vunpack.c.l.b16 %v2490
    %v2854 = vunpack.c.h.b16 %v2490
    %v2855 = vunpack.c.l.b16 %v2491
    %v2856 = vunpack.c.h.b16 %v2491
    %v2857 = vunpack.c.l.b16 %v2492
    %v2858 = vunpack.c.h.b16 %v2492
    %v2859 = vunpack.c.l.b16 %v2493
    %v2860 = vunpack.c.h.b16 %v2493
    %v2861 = vunpack.c.l.b16 %v2494
    %v2862 = vunpack.c.h.b16 %v2494
    %v2863 = vunpack.c.l.b16 %v2495
    %v2864 = vunpack.c.h.b16 %v2495
    %v2865 = vunpack.c.l.b16 %v2496
    %v2866 = vunpack.c.h.b16 %v2496
    %v2867 = vunpack.c.l.b16 %v2497
    %v2868 = vunpack.c.h.b16 %v2497
    %v2869 = vunpack.c.l.b16 %v2498
    %v2870 = vunpack.c.h.b16 %v2498
    %v2871 = vunpack.c.l.b16 %v2499
    %v2872 = vunpack.c.h.b16 %v2499
    %v2873 = vunpack.c.l.b16 %v2500
    %v2874 = vunpack.c.h.b16 %v2500
    %v2875 = vunpack.c.l.b16 %v2501
    %v2876 = vunpack.c.h.b16 %v2501
    %v2877 = vunpack.c.l.b16 %v2502
    %v2878 = vunpack.c.h.b16 %v2502
    %v2879 = vunpack.c.l.b16 %v2503
    %v2880 = vunpack.c.h.b16 %v2503
    %v2881 = vunpack.c.l.b16 %v2504
    %v2882 = vunpack.c.h.b16 %v2504
    %v2883 = vunpack.c.l.b16 %v2505
    %v2884 = vunpack.c.h.b16 %v2505
    %v2885 = vunpack.c.l.b16 %v2506
    %v2886 = vunpack.c.h.b16 %v2506
    %v2887 = vunpack.c.l.b16 %v2507
    %v2888 = vunpack.c.h.b16 %v2507
    %v2889 = vunpack.c.l.b16 %v2508
    %v2890 = vunpack.c.h.b16 %v2508
    %v2891 = vunpack.c.l.b16 %v2509
    %v2892 = vunpack.c.h.b16 %v2509
    %v2893 = vunpack.c.l.b16 %v2510
    %v2894 = vunpack.c.h.b16 %v2510
    %v2895 = vunpack.c.l.b16 %v2511
    %v2896 = vunpack.c.h.b16 %v2511
    %v2897 = vunpack.c.l.b16 %v2512
    %v2898 = vunpack.c.h.b16 %v2512
    %v2899 = vunpack.c.l.b16 %v2513
    %v2900 = vunpack.c.h.b16 %v2513
    %v2901 = vunpack.c.l.b16 %v2514
    %v2902 = vunpack.c.h.b16 %v2514
    %v2903 = vunpack.c.l.b16 %v2515
    %v2904 = vunpack.c.h.b16 %v2515
    %v2905 = vunpack.c.l.b16 %v2516
    %v2906 = vunpack.c.h.b16 %v2516
    %v2907 = vunpack.c.l.b16 %v2517
    %v2908 = vunpack.c.h.b16 %v2517
    %v2909 = vunpack.c.l.b16 %v2518
    %v2910 = vunpack.c.h.b16 %v2518
    %v2911 = vunpack.c.l.b16 %v2519
    %v2912 = vunpack.c.h.b16 %v2519
    %v2913 = vunpack.c.l.b16 %v2520
    %v2914 = vunpack.c.h.b16 %v2520
    %v2915 = vunpack.c.l.b16 %v2521
    %v2916 = vunpack.c.h.b16 %v2521
    %v2917 = vunpack.c.l.b16 %v2522
    %v2918 = vunpack.c.h.b16 %v2522
    %v2919 = vunpack.c.l.b16 %v2523
    %v2920 = vunpack.c.h.b16 %v2523
    %v2921 = vunpack.c.l.b16 %v2524
    %v2922 = vunpack.c.h.b16 %v2524
    %v2923 = vunpack.c.l.b16 %v2525
    %v2924 = vunpack.c.h.b16 %v2525
    %v2925 = vunpack.c.l.b16 %v2526
    %v2926 = vunpack.c.h.b16 %v2526
    %v2927 = vunpack.c.l.b16 %v2527
    %v2928 = vunpack.c.h.b16 %v2527
    %v2929 = vunpack.c.l.b16 %v2528
    %v2930 = vunpack.c.h.b16 %v2528
    %v2931 = vunpack.c.l.b16 %v2529
    %v2932 = vunpack.c.h.b16 %v2529
    %v2933 = vunpack.c.l.b16 %v2530
    %v2934 = vunpack.c.h.b16 %v2530
    %v2935 = vunpack.c.l.b16 %v2531
    %v2936 = vunpack.c.h.b16 %v2531
    %v2937 = vunpack.c.l.b16 %v2532
    %v2938 = vunpack.c.h.b16 %v2532
    %v2939 = vpack.c.b16 %v2687, %v2683
    %v2940 = vpack.c.b16 %v2688, %v2684
    %v2941 = vpack.c.b16 %v2689, %v2685
    %v2942 = vpack.c.b16 %v2690, %v2686
    %v2943 = vpack.c.b16 %v2695, %v2691
    %v2944 = vpack.c.b16 %v2696, %v2692
    %v2945 = vpack.c.b16 %v2697, %v2693
    %v2946 = vpack.c.b16 %v2698, %v2694
    %v2947 = vpack.c.b16 %v2703, %v2699
    %v2948 = vpack.c.b16 %v2704, %v2700
    %v2949 = vpack.c.b16 %v2705, %v2701
    %v2950 = vpack.c.b16 %v2706, %v2702
    %v2951 = vpack.c.b16 %v2711, %v2707
    %v2952 = vpack.c.b16 %v2712, %v2708
    %v2953 = vpack.c.b16 %v2713, %v2709
    %v2954 = vpack.c.b16 %v2714, %v2710
    %v2955 = vpack.c.b16 %v2719, %v2715
    %v2956 = vpack.c.b16 %v2720, %v2716
    %v2957 = vpack.c.b16 %v2721, %v2717
    %v2958 = vpack.c.b16 %v2722, %v2718
    %v2959 = vpack.c.b16 %v2727, %v2723
    %v2960 = vpack.c.b16 %v2728, %v2724
    %v2961 = vpack.c.b16 %v2729, %v2725
    %v2962 = vpack.c.b16 %v2730, %v2726
    %v2963 = vpack.c.b16 %v2735, %v2731
    %v2964 = vpack.c.b16 %v2736, %v2732
    %v2965 = vpack.c.b16 %v2737, %v2733
    %v2966 = vpack.c.b16 %v2738, %v2734
    %v2967 = vpack.c.b16 %v2743, %v2739
    %v2968 = vpack.c.b16 %v2744, %v2740
    %v2969 = vpack.c.b16 %v2745, %v2741
    %v2970 = vpack.c.b16 %v2746, %v2742
    %v2971 = vpack.c.b16 %v2751, %v2747
    %v2972 = vpack.c.b16 %v2752, %v2748
    %v2973 = vpack.c.b16 %v2753, %v2749
    %v2974 = vpack.c.b16 %v2754, %v2750
    %v2975 = vpack.c.b16 %v2759, %v2755
    %v2976 = vpack.c.b16 %v2760, %v2756
    %v2977 = vpack.c.b16 %v2761, %v2757
    %v2978 = vpack.c.b16 %v2762, %v2758
    %v2979 = vpack.c.b16 %v2767, %v2763
    %v2980 = vpack.c.b16 %v2768, %v2764
    %v2981 = vpack.c.b16 %v2769, %v2765
    %v2982 = vpack.c.b16 %v2770, %v2766
    %v2983 = vpack.c.b16 %v2775, %v2771
    %v2984 = vpack.c.b16 %v2776, %v2772
    %v2985 = vpack.c.b16 %v2777, %v2773
    %v2986 = vpack.c.b16 %v2778, %v2774
    %v2987 = vpack.c.b16 %v2783, %v2779
    %v2988 = vpack.c.b16 %v2784, %v2780
    %v2989 = vpack.c.b16 %v2785, %v2781
    %v2990 = vpack.c.b16 %v2786, %v2782
    %v2991 = vpack.c.b16 %v2791, %v2787
    %v2992 = vpack.c.b16 %v2792, %v2788
    %v2993 = vpack.c.b16 %v2793, %v2789
    %v2994 = vpack.c.b16 %v2794, %v2790
    %v2995 = vpack.c.b16 %v2799, %v2795
    %v2996 = vpack.c.b16 %v2800, %v2796
    %v2997 = vpack.c.b16 %v2801, %v2797
    %v2998 = vpack.c.b16 %v2802, %v2798
    %v2999 = vpack.c.b16 %v2807, %v2803
    %v3000 = vpack.c.b16 %v2808, %v2804
    %v3001 = vpack.c.b16 %v2809, %v2805
    %v3002 = vpack.c.b16 %v2810, %v2806
    %v3003 = vpack.c.b16 %v2815, %v2811
    %v3004 = vpack.c.b16 %v2816, %v2812
    %v3005 = vpack.c.b16 %v2817, %v2813
    %v3006 = vpack.c.b16 %v2818, %v2814
    %v3007 = vpack.c.b16 %v2823, %v2819
    %v3008 = vpack.c.b16 %v2824, %v2820
    %v3009 = vpack.c.b16 %v2825, %v2821
    %v3010 = vpack.c.b16 %v2826, %v2822
    %v3011 = vpack.c.b16 %v2831, %v2827
    %v3012 = vpack.c.b16 %v2832, %v2828
    %v3013 = vpack.c.b16 %v2833, %v2829
    %v3014 = vpack.c.b16 %v2834, %v2830
    %v3015 = vpack.c.b16 %v2839, %v2835
    %v3016 = vpack.c.b16 %v2840, %v2836
    %v3017 = vpack.c.b16 %v2841, %v2837
    %v3018 = vpack.c.b16 %v2842, %v2838
    %v3019 = vpack.c.b16 %v2847, %v2843
    %v3020 = vpack.c.b16 %v2848, %v2844
    %v3021 = vpack.c.b16 %v2849, %v2845
    %v3022 = vpack.c.b16 %v2850, %v2846
    %v3023 = vpack.c.b16 %v2855, %v2851
    %v3024 = vpack.c.b16 %v2856, %v2852
    %v3025 = vpack.c.b16 %v2857, %v2853
    %v3026 = vpack.c.b16 %v2858, %v2854
    %v3027 = vpack.c.b16 %v2863, %v2859
    %v3028 = vpack.c.b16 %v2864, %v2860
    %v3029 = vpack.c.b16 %v2865, %v2861
    %v3030 = vpack.c.b16 %v2866, %v2862
    %v3031 = vpack.c.b16 %v2871, %v2867
    %v3032 = vpack.c.b16 %v2872, %v2868
    %v3033 = vpack.c.b16 %v2873, %v2869
    %v3034 = vpack.c.b16 %v2874, %v2870
    %v3035 = vpack.c.b16 %v2879, %v2875
    %v3036 = vpack.c.b16 %v2880, %v2876
    %v3037 = vpack.c.b16 %v2881, %v2877
    %v3038 = vpack.c.b16 %v2882, %v2878
    %v3039 = vpack.c.b16 %v2887, %v2883
    %v3040 = vpack.c.b16 %v2888, %v2884
    %v3041 = vpack.c.b16 %v2889, %v2885
    %v3042 = vpack.c.b16 %v2890, %v2886
    %v3043 = vpack.c.b16 %v2895, %v2891
    %v3044 = vpack.c.b16 %v2896, %v2892
    %v3045 = vpack.c.b16 %v2897, %v2893
    %v3046 = vpack.c.b16 %v2898, %v2894
    %v3047 = vpack.c.b16 %v2903, %v2899
    %v3048 = vpack.c.b16 %v2904, %v2900
    %v3049 = vpack.c.b16 %v2905, %v2901
    %v3050 = vpack.c.b16 %v2906, %v2902
    %v3051 = vpack.c.b16 %v2911, %v2907
    %v3052 = vpack.c.b16 %v2912, %v2908
    %v3053 = vpack.c.b16 %v2913, %v2909
    %v3054 = vpack.c.b16 %v2914, %v2910
    %v3055 = vpack.c.b16 %v2919, %v2915
    %v3056 = vpack.c.b16 %v2920, %v2916
    %v3057 = vpack.c.b16 %v2921, %v2917
    %v3058 = vpack.c.b16 %v2922, %v2918
    %v3059 = vpack.c.b16 %v2927, %v2923
    %v3060 = vpack.c.b16 %v2928, %v2924
    %v3061 = vpack.c.b16 %v2929, %v2925
    %v3062 = vpack.c.b16 %v2930, %v2926
    %v3063 = vpack.c.b16 %v2935, %v2931
    %v3064 = vpack.c.b16 %v2936, %v2932
    %v3065 = vpack.c.b16 %v2937, %v2933
    %v3066 = vpack.c.b16 %v2938, %v2934
    %3195 = vmatprep.subr.bf16.mxu0 %v2968
    %3196 = vmatpush1.bf16.msra.mxu0 %v2967
    %3197 = vmatprep.subr.bf16.mxu0 %v2964
    %3198 = vmatpush1.bf16.msra.mxu0 %v2963
    %3199 = vmatprep.subr.bf16.mxu0 %v2960
    %3200 = vmatpush1.bf16.msra.mxu0 %v2959
    %3201 = vmatprep.subr.bf16.mxu0 %v2956
    %3202 = vmatpush1.bf16.msra.mxu0 %v2955
    %3203 = vmatprep.subr.bf16.mxu0 %v2952
    %3204 = vmatpush1.bf16.msra.mxu0 %v2951
    %3205 = vmatprep.subr.bf16.mxu0 %v2948
    %3206 = vmatpush1.bf16.msra.mxu0 %v2947
    %3207 = vmatprep.subr.bf16.mxu0 %v2944
    %3208 = vmatpush1.bf16.msra.mxu0 %v2943
    %3209 = vmatprep.subr.bf16.mxu0 %v2940
    %3210 = vmatpush1.bf16.msra.mxu0 %v2939
    %3211 = vmatprep.subr.bf16.mxu0 %v3000
    %3212 = vmatpush2.bf16.msra.mxu0 %v2999
    %3213 = vmatprep.subr.bf16.mxu0 %v2996
    %3214 = vmatpush2.bf16.msra.mxu0 %v2995
    %3215 = vmatprep.subr.bf16.mxu0 %v2992
    %3216 = vmatpush2.bf16.msra.mxu0 %v2991
    %3217 = vmatprep.subr.bf16.mxu0 %v2988
    %3218 = vmatpush2.bf16.msra.mxu0 %v2987
    %3219 = vmatprep.subr.bf16.mxu0 %v2984
    %3220 = vmatpush2.bf16.msra.mxu0 %v2983
    %3221 = vmatprep.subr.bf16.mxu0 %v2980
    %3222 = vmatpush2.bf16.msra.mxu0 %v2979
    %3223 = vmatprep.subr.bf16.mxu0 %v2976
    %3224 = vmatpush2.bf16.msra.mxu0 %v2975
    %3225 = vmatprep.subr.bf16.mxu0 %v2972
    %3226 = vmatpush2.bf16.msra.mxu0 %v2971
    %3227 = vmatprep.mubr.bf16.mxu0 %v2402
    %3228 = vmatmul.mubr.bf16.gmra.mxu0 %v2401
    %v3229 = vpop.f32.mrf.mxu0
    %v3230 = vadd.f32 %v2538, %v3229
    %v3231 = vpop.f32.mrf.mxu0
    %v3232 = vadd.f32 %v2542, %v3231
    %v3233 = vpop.f32.mrf.mxu0
    %v3234 = vpop.f32.mrf.mxu0
    %3235 = vdwg.mxu0
    %3236 = vmatprep.subr.bf16.mxu0 %v3032
    %3237 = vmatpush1.bf16.msra.mxu0 %v3031
    %3238 = vmatprep.subr.bf16.mxu0 %v3028
    %3239 = vmatpush1.bf16.msra.mxu0 %v3027
    %3240 = vmatprep.subr.bf16.mxu0 %v3024
    %3241 = vmatpush1.bf16.msra.mxu0 %v3023
    %3242 = vmatprep.subr.bf16.mxu0 %v3020
    %3243 = vmatpush1.bf16.msra.mxu0 %v3019
    %3244 = vmatprep.subr.bf16.mxu0 %v3016
    %3245 = vmatpush1.bf16.msra.mxu0 %v3015
    %3246 = vmatprep.subr.bf16.mxu0 %v3012
    %3247 = vmatpush1.bf16.msra.mxu0 %v3011
    %3248 = vmatprep.subr.bf16.mxu0 %v3008
    %3249 = vmatpush1.bf16.msra.mxu0 %v3007
    %3250 = vmatprep.subr.bf16.mxu0 %v3004
    %3251 = vmatpush1.bf16.msra.mxu0 %v3003
    %3252 = vmatprep.subr.bf16.mxu0 %v3064
    %3253 = vmatpush2.bf16.msra.mxu0 %v3063
    %3254 = vmatprep.subr.bf16.mxu0 %v3060
    %3255 = vmatpush2.bf16.msra.mxu0 %v3059
    %3256 = vmatprep.subr.bf16.mxu0 %v3056
    %3257 = vmatpush2.bf16.msra.mxu0 %v3055
    %3258 = vmatprep.subr.bf16.mxu0 %v3052
    %3259 = vmatpush2.bf16.msra.mxu0 %v3051
    %3260 = vmatprep.subr.bf16.mxu0 %v3048
    %3261 = vmatpush2.bf16.msra.mxu0 %v3047
    %3262 = vmatprep.subr.bf16.mxu0 %v3044
    %3263 = vmatpush2.bf16.msra.mxu0 %v3043
    %3264 = vmatprep.subr.bf16.mxu0 %v3040
    %3265 = vmatpush2.bf16.msra.mxu0 %v3039
    %3266 = vmatprep.subr.bf16.mxu0 %v3036
    %3267 = vmatpush2.bf16.msra.mxu0 %v3035
    %3268 = vmatprep.mubr.bf16.mxu0 %v2404
    %3269 = vmatmul.mubr.bf16.gmra.mxu0 %v2403
    %v3270 = vpop.f32.mrf.mxu0
    %v3271 = vadd.f32 %v3230, %v3270
    %v3272 = vpop.f32.mrf.mxu0
    %v3273 = vadd.f32 %v3232, %v3272
    %v3274 = vpop.f32.mrf.mxu0
    %v3275 = vpop.f32.mrf.mxu0
    %3276 = vdwg.mxu0
    %3277 = vmatprep.subr.bf16.mxu0 %v2970
    %3278 = vmatpush1.bf16.msra.mxu0 %v2969
    %3279 = vmatprep.subr.bf16.mxu0 %v2966
    %3280 = vmatpush1.bf16.msra.mxu0 %v2965
    %3281 = vmatprep.subr.bf16.mxu0 %v2962
    %3282 = vmatpush1.bf16.msra.mxu0 %v2961
    %3283 = vmatprep.subr.bf16.mxu0 %v2958
    %3284 = vmatpush1.bf16.msra.mxu0 %v2957
    %3285 = vmatprep.subr.bf16.mxu0 %v2954
    %3286 = vmatpush1.bf16.msra.mxu0 %v2953
    %3287 = vmatprep.subr.bf16.mxu0 %v2950
    %3288 = vmatpush1.bf16.msra.mxu0 %v2949
    %3289 = vmatprep.subr.bf16.mxu0 %v2946
    %3290 = vmatpush1.bf16.msra.mxu0 %v2945
    %3291 = vmatprep.subr.bf16.mxu0 %v2942
    %3292 = vmatpush1.bf16.msra.mxu0 %v2941
    %3293 = vmatprep.subr.bf16.mxu0 %v3002
    %3294 = vmatpush2.bf16.msra.mxu0 %v3001
    %3295 = vmatprep.subr.bf16.mxu0 %v2998
    %3296 = vmatpush2.bf16.msra.mxu0 %v2997
    %3297 = vmatprep.subr.bf16.mxu0 %v2994
    %3298 = vmatpush2.bf16.msra.mxu0 %v2993
    %3299 = vmatprep.subr.bf16.mxu0 %v2990
    %3300 = vmatpush2.bf16.msra.mxu0 %v2989
    %3301 = vmatprep.subr.bf16.mxu0 %v2986
    %3302 = vmatpush2.bf16.msra.mxu0 %v2985
    %3303 = vmatprep.subr.bf16.mxu0 %v2982
    %3304 = vmatpush2.bf16.msra.mxu0 %v2981
    %3305 = vmatprep.subr.bf16.mxu0 %v2978
    %3306 = vmatpush2.bf16.msra.mxu0 %v2977
    %3307 = vmatprep.subr.bf16.mxu0 %v2974
    %3308 = vmatpush2.bf16.msra.mxu0 %v2973
    %3309 = vmatprep.mubr.bf16.mxu0 %v2402
    %3310 = vmatmul.mubr.bf16.gmra.mxu0 %v2401
    %v3311 = vpop.f32.mrf.mxu0
    %v3312 = vadd.f32 %v2546, %v3311
    %v3313 = vpop.f32.mrf.mxu0
    %v3314 = vadd.f32 %v2550, %v3313
    %v3315 = vpop.f32.mrf.mxu0
    %v3316 = vpop.f32.mrf.mxu0
    %3317 = vdwg.mxu0
    %3318 = vmatprep.subr.bf16.mxu0 %v3034
    %3319 = vmatpush1.bf16.msra.mxu0 %v3033
    %3320 = vmatprep.subr.bf16.mxu0 %v3030
    %3321 = vmatpush1.bf16.msra.mxu0 %v3029
    %3322 = vmatprep.subr.bf16.mxu0 %v3026
    %3323 = vmatpush1.bf16.msra.mxu0 %v3025
    %3324 = vmatprep.subr.bf16.mxu0 %v3022
    %3325 = vmatpush1.bf16.msra.mxu0 %v3021
    %3326 = vmatprep.subr.bf16.mxu0 %v3018
    %3327 = vmatpush1.bf16.msra.mxu0 %v3017
    %3328 = vmatprep.subr.bf16.mxu0 %v3014
    %3329 = vmatpush1.bf16.msra.mxu0 %v3013
    %3330 = vmatprep.subr.bf16.mxu0 %v3010
    %3331 = vmatpush1.bf16.msra.mxu0 %v3009
    %3332 = vmatprep.subr.bf16.mxu0 %v3006
    %3333 = vmatpush1.bf16.msra.mxu0 %v3005
    %3334 = vmatprep.subr.bf16.mxu0 %v3066
    %3335 = vmatpush2.bf16.msra.mxu0 %v3065
    %3336 = vmatprep.subr.bf16.mxu0 %v3062
    %3337 = vmatpush2.bf16.msra.mxu0 %v3061
    %3338 = vmatprep.subr.bf16.mxu0 %v3058
    %3339 = vmatpush2.bf16.msra.mxu0 %v3057
    %3340 = vmatprep.subr.bf16.mxu0 %v3054
    %3341 = vmatpush2.bf16.msra.mxu0 %v3053
    %3342 = vmatprep.subr.bf16.mxu0 %v3050
    %3343 = vmatpush2.bf16.msra.mxu0 %v3049
    %3344 = vmatprep.subr.bf16.mxu0 %v3046
    %3345 = vmatpush2.bf16.msra.mxu0 %v3045
    %3346 = vmatprep.subr.bf16.mxu0 %v3042
    %3347 = vmatpush2.bf16.msra.mxu0 %v3041
    %3348 = vmatprep.subr.bf16.mxu0 %v3038
    %3349 = vmatpush2.bf16.msra.mxu0 %v3037
    %3350 = vmatprep.mubr.bf16.mxu0 %v2404
    %3351 = vmatmul.mubr.bf16.gmra.mxu0 %v2403
    %v3352 = vpop.f32.mrf.mxu0
    %v3353 = vadd.f32 %v3312, %v3352
    %v3354 = vpop.f32.mrf.mxu0
    %v3355 = vadd.f32 %v3314, %v3354
    %v3356 = vpop.f32.mrf.mxu0
    %v3357 = vpop.f32.mrf.mxu0
    %3358 = vdwg.mxu0
    %3359 = vst [vmem:[%s13] sm:$0xff] %v3271
    %3360 = vst [vmem:[%s13 + $0x8] sm:$0xff] %v3273
    %3361 = vst [vmem:[%s13 + $0x10] sm:$0xff] %v3353
    %3362 = vst [vmem:[%s13 + $0x18] sm:$0xff] %v3355
    // Predicated region
    $region74: #{ccnn2_forward.1} parent=1 // pred_check
      _
    $region75: #{ccnn2_forward.1} parent=1 // pred_check_branch
      %3364 = sbr.rel (0) target = $region77
    $region76: #{ccnn2_forward.1} parent=1 // pred_region
      _
    $region77: #{ccnn2_forward.1} parent=1 // pred_fallthru
      _
    // Predicated region
    $region78: #{ccnn2_forward.1} parent=1 // pred_check
      _
    $region79: #{ccnn2_forward.1} parent=1 // pred_check_branch
      %3366 = sbr.rel (0) target = $region81
    $region80: #{ccnn2_forward.1} parent=1 // pred_region
      _
    $region81: #{ccnn2_forward.1} parent=1 // pred_fallthru
      _
    %3367 = vsyncpa [#allocation3], 1
    %3368 = vsyncpa [#allocation5], 1
    %3369 = vsyncpa [#allocation8], 1

</llo_original>
